<compile_context>
chip_gen: v5e
topology: v5e:2x2
jax: 0.10.0
libtpu: 0.0.40
codegen_flags: <defaults>
</compile_context>

<pallas_src>
import numpy as np

import jax
import jax.numpy as jnp
from jax.experimental import pallas as pl
from jax.experimental.pallas import tpu as pltpu


# ----------------------------------------------------------------------------
# Fused kernel: one grid step == one image
# ----------------------------------------------------------------------------
def _res_fused_kernel(x_ref, wb1_ref, s1_ref, t1_ref, wb2_ref, s2_ref, t2_ref,
                      fw1_ref, fb1_ref, fw2_ref, fb2_ref, o_ref):
    """Fused Res block for one image.

    x_ref, o_ref : (1, H, W*C)    packed NHWC activations (lane-dense)
    wb*_ref      : (3, W*C, W*C)  block-banded conv weights, index = ky tap
    s*_ref,t*_ref: (1, W*C)       folded BN scale / bias, tiled per pixel
    fw1_ref      : (C//8, C)      SE fc1 weight (torch layout)
    fb1_ref      : (C//8, 1)      SE fc1 bias
    fw2_ref      : (C//8, W*C)    SE fc2 weight (transposed, tiled per pixel)
    fb2_ref      : (1, W*C)       SE fc2 bias, tiled per pixel
    """
    _, H, WC = o_ref.shape
    Cr, C = fw1_ref.shape
    W = WC // C

    xin = x_ref[0]                                            # (H, WC)
    # hoisted once, reused by both conv blocks
    row = jax.lax.broadcasted_iota(jnp.int32, (H, WC), 0)

    def conv_bn_relu(a, wb_ref, s_ref, t_ref):
        # Rows shifted by +-1 with zero fill (H padding); W padding is encoded
        # in the band structure of wb.  roll = XLU sublane rotation (cheap).
        a_m1 = jnp.where(row >= 1, pltpu.roll(a, shift=1, axis=0), 0.0)        # a[h-1]
        a_p1 = jnp.where(row < H - 1, pltpu.roll(a, shift=H - 1, axis=0), 0.0)  # a[h+1]
        acc = jnp.dot(a_m1, wb_ref[0], preferred_element_type=jnp.float32)
        acc += jnp.dot(a, wb_ref[1], preferred_element_type=jnp.float32)
        acc += jnp.dot(a_p1, wb_ref[2], preferred_element_type=jnp.float32)
        return jnp.maximum(acc * s_ref[...] + t_ref[...], 0.0)

    x1 = conv_bn_relu(xin, wb1_ref, s1_ref, t1_ref)
    x2 = conv_bn_relu(x1, wb2_ref, s2_ref, t2_ref)

    # --- squeeze-excite gate: VPU/XLU only (no 1-row MXU dots) ---------------
    colsum = jnp.sum(x2, axis=0, keepdims=True)               # (1, WC), sublane reduce
    pooled = colsum[:, 0:C]
    for w in range(1, W):                                     # fold the W pixel blocks
        pooled = pooled + colsum[:, w * C:(w + 1) * C]
    pooled = pooled * (1.0 / (H * W))                         # (1, C) global avg pool

    h = jnp.sum(pooled * fw1_ref[...], axis=1, keepdims=True) + fb1_ref[...]   # (Cr,1)
    h = jnp.maximum(h, 0.0)
    z = jnp.sum(h * fw2_ref[...], axis=0, keepdims=True) + fb2_ref[...]        # (1,WC)
    y = jax.nn.sigmoid(z)                                     # gate, already pixel-tiled

    # --- gate + residual, lane-dense (unmasked) store ------------------------
    o_ref[0] = x2 * y + xin


# ----------------------------------------------------------------------------
# pallas_call wrapper
# ----------------------------------------------------------------------------
def res_forward(x_packed, p):
    """x_packed: (B, H, W*C) float32 packed NHWC.  Returns same packed layout."""
    B, H, WC = x_packed.shape

    def c3(_b):
        return (0, 0, 0)

    def c2(_b):
        return (0, 0)

    return pl.pallas_call(
        _res_fused_kernel,
        out_shape=jax.ShapeDtypeStruct((B, H, WC), jnp.float32),
        grid=(B,),
        in_specs=[
            pl.BlockSpec((1, H, WC), lambda b: (b, 0, 0)),
            pl.BlockSpec(p["wb1"].shape, c3),
            pl.BlockSpec(p["s1"].shape, c2),
            pl.BlockSpec(p["t1"].shape, c2),
            pl.BlockSpec(p["wb2"].shape, c3),
            pl.BlockSpec(p["s2"].shape, c2),
            pl.BlockSpec(p["t2"].shape, c2),
            pl.BlockSpec(p["fc_w1"].shape, c2),
            pl.BlockSpec(p["fc_b1"].shape, c2),
            pl.BlockSpec(p["fc_w2p"].shape, c2),
            pl.BlockSpec(p["fc_b2p"].shape, c2),
        ],
        out_specs=pl.BlockSpec((1, H, WC), lambda b: (b, 0, 0)),
        input_output_aliases={0: 0},          # residual input shares the output buffer
        compiler_params=pltpu.CompilerParams(
            dimension_semantics=("parallel",)),   # v7x: one image per TensorCore
    )(x_packed, p["wb1"], p["s1"], p["t1"], p["wb2"], p["s2"], p["t2"],
      p["fc_w1"], p["fc_b1"], p["fc_w2p"], p["fc_b2p"])


# ----------------------------------------------------------------------------
# Parameter construction (deterministic, synthetic) + pure-JAX reference
# ----------------------------------------------------------------------------
def make_params(C, H, W, key):
    ks = jax.random.split(key, 16)
    eps = 1e-5
    WC = W * C
    Cr = C // 8

    def conv_block(k0, k1, k2, k3, k4, k5):
        w = 0.1 * jax.random.normal(k0, (C, C, 3, 3), jnp.float32)   # OIHW (torch)
        b = 0.1 * jax.random.normal(k1, (C,), jnp.float32)
        gamma = 1.0 + 0.05 * jax.random.normal(k2, (C,), jnp.float32)
        beta = 0.05 * jax.random.normal(k3, (C,), jnp.float32)
        mean = 0.05 * jax.random.normal(k4, (C,), jnp.float32)
        var = 1.0 + 0.1 * jnp.abs(jax.random.normal(k5, (C,), jnp.float32))
        s = gamma / jnp.sqrt(var + eps)          # folded BN scale
        t = beta + s * (b - mean)                # folded BN bias (includes conv bias)
        return w, s, t

    w1, s1, t1 = conv_block(*ks[0:6])
    w2, s2, t2 = conv_block(*ks[6:12])

    fc_w1 = 0.1 * jax.random.normal(ks[12], (Cr, C), jnp.float32)    # Linear(C->Cr).weight
    fc_b1 = 0.1 * jax.random.normal(ks[13], (Cr,), jnp.float32)
    fc_w2 = 0.1 * jax.random.normal(ks[14], (C, Cr), jnp.float32)    # Linear(Cr->C).weight
    fc_b2 = 0.1 * jax.random.normal(ks[15], (C,), jnp.float32)

    def band(w_oihw):
        """OIHW 3x3 weight -> (3, W*C, W*C) block-banded matrices (one per ky).

        M[ky][ws*C + ci, wo*C + co] = w[co, ci, ky, kx] with ws = wo + kx - 1;
        missing off-band blocks implement the zero padding along W.
        """
        wn = np.asarray(w_oihw)
        M = np.zeros((3, WC, WC), np.float32)
        for ky in range(3):
            for kx in range(3):
                blk = wn[:, :, ky, kx].T                      # (ci, co)
                for wo in range(W):
                    ws = wo + kx - 1
                    if 0 <= ws < W:
                        M[ky, ws * C:(ws + 1) * C, wo * C:(wo + 1) * C] = blk
        return jnp.asarray(M)

    def tile_c(v):                                            # (C,) -> (1, W*C)
        return jnp.tile(jnp.reshape(v, (1, C)), (1, W))

    params = dict(
        wb1=band(w1), s1=tile_c(s1), t1=tile_c(t1),
        wb2=band(w2), s2=tile_c(s2), t2=tile_c(t2),
        fc_w1=fc_w1, fc_b1=fc_b1.reshape(Cr, 1),
        fc_w2p=jnp.tile(fc_w2.T, (1, W)),                     # (Cr, W*C)
        fc_b2p=tile_c(fc_b2),                                 # (1, W*C)
    )
    ref = dict(w1=w1, s1=s1, t1=t1, w2=w2, s2=s2, t2=t2,
               fw1=fc_w1.T, fb1=fc_b1, fw2=fc_w2.T, fb2=fc_b2)
    return params, ref


def ref_forward(x_nhwc, r):
    def blk(x, w_oihw, s, t):
        y = jax.lax.conv_general_dilated(
            x, jnp.transpose(w_oihw, (2, 3, 1, 0)), (1, 1), ((1, 1), (1, 1)),
            dimension_numbers=("NHWC", "HWIO", "NHWC"))
        return jnp.maximum(y * s[None, None, None, :] + t[None, None, None, :], 0.0)

    x1 = blk(x_nhwc, r["w1"], r["s1"], r["t1"])
    x2 = blk(x1, r["w2"], r["s2"], r["t2"])
    pooled = jnp.mean(x2, axis=(1, 2))                               # (B, C)
    h = jnp.maximum(pooled @ r["fw1"] + r["fb1"], 0.0)
    y = jax.nn.sigmoid(h @ r["fw2"] + r["fb2"])
    return x2 * y[:, None, None, :] + x_nhwc


# ----------------------------------------------------------------------------
if __name__ == "__main__":
    B, C, H, W = 2, 16, 16, 16   # channel_num=16 so fc hidden = C//8 = 2

    x_nchw = jax.random.normal(jax.random.PRNGKey(0), (B, C, H, W), jnp.float32)
    x_nhwc = jnp.transpose(x_nchw, (0, 2, 3, 1))
    x_packed = x_nhwc.reshape(B, H, W * C)        # lane-dense packed layout

    params, ref_params = make_params(C, H, W, jax.random.PRNGKey(42))

    expected = ref_forward(x_nhwc, ref_params)    # computed before the kernel call

    out_packed = jax.block_until_ready(res_forward(x_packed, params))
    out = out_packed.reshape(B, H, W, C)

    assert out.shape == (B, H, W, C)
    err = float(jnp.max(jnp.abs(out - expected)))
    assert jnp.allclose(out, expected, atol=2e-4, rtol=2e-4), err

    print("KERNEL_OK")
</pallas_src>

<mosaic_0001>
module attributes {stable_mosaic.version = 11 : i64} {
  func.func @_res_fused_kernel(%arg0: i32, %arg1: memref<1x16x256xf32, #tpu.memory_space<vmem>>, %arg2: memref<3x256x256xf32, #tpu.memory_space<vmem>>, %arg3: memref<1x256xf32, #tpu.memory_space<vmem>>, %arg4: memref<1x256xf32, #tpu.memory_space<vmem>>, %arg5: memref<3x256x256xf32, #tpu.memory_space<vmem>>, %arg6: memref<1x256xf32, #tpu.memory_space<vmem>>, %arg7: memref<1x256xf32, #tpu.memory_space<vmem>>, %arg8: memref<2x16xf32, #tpu.memory_space<vmem>>, %arg9: memref<2x1xf32, #tpu.memory_space<vmem>>, %arg10: memref<2x256xf32, #tpu.memory_space<vmem>>, %arg11: memref<1x256xf32, #tpu.memory_space<vmem>>, %arg12: memref<1x16x256xf32, #tpu.memory_space<vmem>>) attributes {dimension_semantics = [#tpu.dimension_semantics<parallel>], iteration_bounds = array<i64: 2>, scalar_prefetch = 0 : i64, scratch_operands = 0 : i64, tpu.core_type = #tpu.core_type<tc>, window_params = [{transform_indices = @transform_0, window_bounds = array<i64: 1, 16, 256>}, {pipeline_mode = #tpu.pipeline_mode<synchronous>, transform_indices = @transform_1, window_bounds = array<i64: 3, 256, 256>}, {pipeline_mode = #tpu.pipeline_mode<synchronous>, transform_indices = @transform_2, window_bounds = array<i64: 1, 256>}, {pipeline_mode = #tpu.pipeline_mode<synchronous>, transform_indices = @transform_3, window_bounds = array<i64: 1, 256>}, {pipeline_mode = #tpu.pipeline_mode<synchronous>, transform_indices = @transform_4, window_bounds = array<i64: 3, 256, 256>}, {pipeline_mode = #tpu.pipeline_mode<synchronous>, transform_indices = @transform_5, window_bounds = array<i64: 1, 256>}, {pipeline_mode = #tpu.pipeline_mode<synchronous>, transform_indices = @transform_6, window_bounds = array<i64: 1, 256>}, {pipeline_mode = #tpu.pipeline_mode<synchronous>, transform_indices = @transform_7, window_bounds = array<i64: 2, 16>}, {pipeline_mode = #tpu.pipeline_mode<synchronous>, transform_indices = @transform_8, window_bounds = array<i64: 2, 1>}, {pipeline_mode = #tpu.pipeline_mode<synchronous>, transform_indices = @transform_9, window_bounds = array<i64: 2, 256>}, {pipeline_mode = #tpu.pipeline_mode<synchronous>, transform_indices = @transform_10, window_bounds = array<i64: 1, 256>}, {transform_indices = @transform_11, window_bounds = array<i64: 1, 16, 256>}]} {
    %c0 = arith.constant 0 : index
    %c0_0 = arith.constant 0 : index
    %c0_1 = arith.constant 0 : index
    %0 = vector.load %arg1[%c0, %c0_0, %c0_1] : memref<1x16x256xf32, #tpu.memory_space<vmem>>, vector<1x16x256xf32>
    %1 = vector.shape_cast %0 : vector<1x16x256xf32> to vector<16x256xf32>
    %2 = tpu.iota {dimensions = array<i32: 0>} : vector<16x256xi32>
    %c1_i32 = arith.constant 1 : i32
    %3 = vector.broadcast %c1_i32 : i32 to vector<16x256xi32>
    %4 = arith.cmpi sge, %2, %3 : vector<16x256xi32>
    %c1_i32_2 = arith.constant 1 : i32
    %5 = tpu.dynamic_rotate %1 by %c1_i32_2 dim 0 : vector<16x256xf32>, i32 -> vector<16x256xf32>
    %cst = arith.constant 0.000000e+00 : f32
    %6 = vector.broadcast %cst : f32 to vector<16x256xf32>
    %7 = arith.select %4, %5, %6 : vector<16x256xi1>, vector<16x256xf32>
    %c15_i32 = arith.constant 15 : i32
    %8 = vector.broadcast %c15_i32 : i32 to vector<16x256xi32>
    %9 = arith.cmpi slt, %2, %8 : vector<16x256xi32>
    %c15_i32_3 = arith.constant 15 : i32
    %10 = tpu.dynamic_rotate %1 by %c15_i32_3 dim 0 : vector<16x256xf32>, i32 -> vector<16x256xf32>
    %cst_4 = arith.constant 0.000000e+00 : f32
    %11 = vector.broadcast %cst_4 : f32 to vector<16x256xf32>
    %12 = arith.select %9, %10, %11 : vector<16x256xi1>, vector<16x256xf32>
    %c0_5 = arith.constant 0 : index
    %c0_6 = arith.constant 0 : index
    %c0_7 = arith.constant 0 : index
    %13 = vector.load %arg2[%c0_5, %c0_6, %c0_7] : memref<3x256x256xf32, #tpu.memory_space<vmem>>, vector<1x256x256xf32>
    %14 = vector.shape_cast %13 : vector<1x256x256xf32> to vector<256x256xf32>
    %cst_8 = arith.constant dense<0.000000e+00> : vector<16x256xf32>
    %15 = tpu.matmul %7, %14, %cst_8 {dimension_numbers = #tpu.dot_dimension_numbers<[1], [0], [0], [1], [0, 0, 1, 1], [], []>} : vector<16x256xf32>, vector<256x256xf32>, vector<16x256xf32> -> vector<16x256xf32>
    %c1 = arith.constant 1 : index
    %c0_9 = arith.constant 0 : index
    %c0_10 = arith.constant 0 : index
    %16 = vector.load %arg2[%c1, %c0_9, %c0_10] : memref<3x256x256xf32, #tpu.memory_space<vmem>>, vector<1x256x256xf32>
    %17 = vector.shape_cast %16 : vector<1x256x256xf32> to vector<256x256xf32>
    %cst_11 = arith.constant dense<0.000000e+00> : vector<16x256xf32>
    %18 = tpu.matmul %1, %17, %cst_11 {dimension_numbers = #tpu.dot_dimension_numbers<[1], [0], [0], [1], [0, 0, 1, 1], [], []>} : vector<16x256xf32>, vector<256x256xf32>, vector<16x256xf32> -> vector<16x256xf32>
    %19 = arith.addf %15, %18 : vector<16x256xf32>
    %c2 = arith.constant 2 : index
    %c0_12 = arith.constant 0 : index
    %c0_13 = arith.constant 0 : index
    %20 = vector.load %arg2[%c2, %c0_12, %c0_13] : memref<3x256x256xf32, #tpu.memory_space<vmem>>, vector<1x256x256xf32>
    %21 = vector.shape_cast %20 : vector<1x256x256xf32> to vector<256x256xf32>
    %cst_14 = arith.constant dense<0.000000e+00> : vector<16x256xf32>
    %22 = tpu.matmul %12, %21, %cst_14 {dimension_numbers = #tpu.dot_dimension_numbers<[1], [0], [0], [1], [0, 0, 1, 1], [], []>} : vector<16x256xf32>, vector<256x256xf32>, vector<16x256xf32> -> vector<16x256xf32>
    %23 = arith.addf %19, %22 : vector<16x256xf32>
    %c0_15 = arith.constant 0 : index
    %c0_16 = arith.constant 0 : index
    %24 = vector.load %arg3[%c0_15, %c0_16] : memref<1x256xf32, #tpu.memory_space<vmem>>, vector<1x256xf32>
    %25 = vector.broadcast %24 : vector<1x256xf32> to vector<16x256xf32>
    %26 = arith.mulf %23, %25 : vector<16x256xf32>
    %c0_17 = arith.constant 0 : index
    %c0_18 = arith.constant 0 : index
    %27 = vector.load %arg4[%c0_17, %c0_18] : memref<1x256xf32, #tpu.memory_space<vmem>>, vector<1x256xf32>
    %28 = vector.broadcast %27 : vector<1x256xf32> to vector<16x256xf32>
    %29 = arith.addf %26, %28 : vector<16x256xf32>
    %cst_19 = arith.constant 0.000000e+00 : f32
    %30 = vector.broadcast %cst_19 : f32 to vector<16x256xf32>
    %31 = arith.maximumf %29, %30 : vector<16x256xf32>
    %c1_i32_20 = arith.constant 1 : i32
    %32 = vector.broadcast %c1_i32_20 : i32 to vector<16x256xi32>
    %33 = arith.cmpi sge, %2, %32 : vector<16x256xi32>
    %c1_i32_21 = arith.constant 1 : i32
    %34 = tpu.dynamic_rotate %31 by %c1_i32_21 dim 0 : vector<16x256xf32>, i32 -> vector<16x256xf32>
    %cst_22 = arith.constant 0.000000e+00 : f32
    %35 = vector.broadcast %cst_22 : f32 to vector<16x256xf32>
    %36 = arith.select %33, %34, %35 : vector<16x256xi1>, vector<16x256xf32>
    %c15_i32_23 = arith.constant 15 : i32
    %37 = vector.broadcast %c15_i32_23 : i32 to vector<16x256xi32>
    %38 = arith.cmpi slt, %2, %37 : vector<16x256xi32>
    %c15_i32_24 = arith.constant 15 : i32
    %39 = tpu.dynamic_rotate %31 by %c15_i32_24 dim 0 : vector<16x256xf32>, i32 -> vector<16x256xf32>
    %cst_25 = arith.constant 0.000000e+00 : f32
    %40 = vector.broadcast %cst_25 : f32 to vector<16x256xf32>
    %41 = arith.select %38, %39, %40 : vector<16x256xi1>, vector<16x256xf32>
    %c0_26 = arith.constant 0 : index
    %c0_27 = arith.constant 0 : index
    %c0_28 = arith.constant 0 : index
    %42 = vector.load %arg5[%c0_26, %c0_27, %c0_28] : memref<3x256x256xf32, #tpu.memory_space<vmem>>, vector<1x256x256xf32>
    %43 = vector.shape_cast %42 : vector<1x256x256xf32> to vector<256x256xf32>
    %cst_29 = arith.constant dense<0.000000e+00> : vector<16x256xf32>
    %44 = tpu.matmul %36, %43, %cst_29 {dimension_numbers = #tpu.dot_dimension_numbers<[1], [0], [0], [1], [0, 0, 1, 1], [], []>} : vector<16x256xf32>, vector<256x256xf32>, vector<16x256xf32> -> vector<16x256xf32>
    %c1_30 = arith.constant 1 : index
    %c0_31 = arith.constant 0 : index
    %c0_32 = arith.constant 0 : index
    %45 = vector.load %arg5[%c1_30, %c0_31, %c0_32] : memref<3x256x256xf32, #tpu.memory_space<vmem>>, vector<1x256x256xf32>
    %46 = vector.shape_cast %45 : vector<1x256x256xf32> to vector<256x256xf32>
    %cst_33 = arith.constant dense<0.000000e+00> : vector<16x256xf32>
    %47 = tpu.matmul %31, %46, %cst_33 {dimension_numbers = #tpu.dot_dimension_numbers<[1], [0], [0], [1], [0, 0, 1, 1], [], []>} : vector<16x256xf32>, vector<256x256xf32>, vector<16x256xf32> -> vector<16x256xf32>
    %48 = arith.addf %44, %47 : vector<16x256xf32>
    %c2_34 = arith.constant 2 : index
    %c0_35 = arith.constant 0 : index
    %c0_36 = arith.constant 0 : index
    %49 = vector.load %arg5[%c2_34, %c0_35, %c0_36] : memref<3x256x256xf32, #tpu.memory_space<vmem>>, vector<1x256x256xf32>
    %50 = vector.shape_cast %49 : vector<1x256x256xf32> to vector<256x256xf32>
    %cst_37 = arith.constant dense<0.000000e+00> : vector<16x256xf32>
    %51 = tpu.matmul %41, %50, %cst_37 {dimension_numbers = #tpu.dot_dimension_numbers<[1], [0], [0], [1], [0, 0, 1, 1], [], []>} : vector<16x256xf32>, vector<256x256xf32>, vector<16x256xf32> -> vector<16x256xf32>
    %52 = arith.addf %48, %51 : vector<16x256xf32>
    %c0_38 = arith.constant 0 : index
    %c0_39 = arith.constant 0 : index
    %53 = vector.load %arg6[%c0_38, %c0_39] : memref<1x256xf32, #tpu.memory_space<vmem>>, vector<1x256xf32>
    %54 = vector.broadcast %53 : vector<1x256xf32> to vector<16x256xf32>
    %55 = arith.mulf %52, %54 : vector<16x256xf32>
    %c0_40 = arith.constant 0 : index
    %c0_41 = arith.constant 0 : index
    %56 = vector.load %arg7[%c0_40, %c0_41] : memref<1x256xf32, #tpu.memory_space<vmem>>, vector<1x256xf32>
    %57 = vector.broadcast %56 : vector<1x256xf32> to vector<16x256xf32>
    %58 = arith.addf %55, %57 : vector<16x256xf32>
    %cst_42 = arith.constant 0.000000e+00 : f32
    %59 = vector.broadcast %cst_42 : f32 to vector<16x256xf32>
    %60 = arith.maximumf %58, %59 : vector<16x256xf32>
    %cst_43 = arith.constant dense<0.000000e+00> : vector<256xf32>
    %61 = vector.multi_reduction <add>, %60, %cst_43 [0] : vector<16x256xf32> to vector<256xf32>
    %62 = vector.shape_cast %61 : vector<256xf32> to vector<1x256xf32>
    %63 = vector.extract_strided_slice %62 {offsets = [0, 0], sizes = [1, 16], strides = [1, 1]} : vector<1x256xf32> to vector<1x16xf32>
    %64 = vector.extract_strided_slice %62 {offsets = [0, 16], sizes = [1, 16], strides = [1, 1]} : vector<1x256xf32> to vector<1x16xf32>
    %65 = arith.addf %63, %64 : vector<1x16xf32>
    %66 = vector.extract_strided_slice %62 {offsets = [0, 32], sizes = [1, 16], strides = [1, 1]} : vector<1x256xf32> to vector<1x16xf32>
    %67 = arith.addf %65, %66 : vector<1x16xf32>
    %68 = vector.extract_strided_slice %62 {offsets = [0, 48], sizes = [1, 16], strides = [1, 1]} : vector<1x256xf32> to vector<1x16xf32>
    %69 = arith.addf %67, %68 : vector<1x16xf32>
    %70 = vector.extract_strided_slice %62 {offsets = [0, 64], sizes = [1, 16], strides = [1, 1]} : vector<1x256xf32> to vector<1x16xf32>
    %71 = arith.addf %69, %70 : vector<1x16xf32>
    %72 = vector.extract_strided_slice %62 {offsets = [0, 80], sizes = [1, 16], strides = [1, 1]} : vector<1x256xf32> to vector<1x16xf32>
    %73 = arith.addf %71, %72 : vector<1x16xf32>
    %74 = vector.extract_strided_slice %62 {offsets = [0, 96], sizes = [1, 16], strides = [1, 1]} : vector<1x256xf32> to vector<1x16xf32>
    %75 = arith.addf %73, %74 : vector<1x16xf32>
    %76 = vector.extract_strided_slice %62 {offsets = [0, 112], sizes = [1, 16], strides = [1, 1]} : vector<1x256xf32> to vector<1x16xf32>
    %77 = arith.addf %75, %76 : vector<1x16xf32>
    %78 = vector.extract_strided_slice %62 {offsets = [0, 128], sizes = [1, 16], strides = [1, 1]} : vector<1x256xf32> to vector<1x16xf32>
    %79 = arith.addf %77, %78 : vector<1x16xf32>
    %80 = vector.extract_strided_slice %62 {offsets = [0, 144], sizes = [1, 16], strides = [1, 1]} : vector<1x256xf32> to vector<1x16xf32>
    %81 = arith.addf %79, %80 : vector<1x16xf32>
    %82 = vector.extract_strided_slice %62 {offsets = [0, 160], sizes = [1, 16], strides = [1, 1]} : vector<1x256xf32> to vector<1x16xf32>
    %83 = arith.addf %81, %82 : vector<1x16xf32>
    %84 = vector.extract_strided_slice %62 {offsets = [0, 176], sizes = [1, 16], strides = [1, 1]} : vector<1x256xf32> to vector<1x16xf32>
    %85 = arith.addf %83, %84 : vector<1x16xf32>
    %86 = vector.extract_strided_slice %62 {offsets = [0, 192], sizes = [1, 16], strides = [1, 1]} : vector<1x256xf32> to vector<1x16xf32>
    %87 = arith.addf %85, %86 : vector<1x16xf32>
    %88 = vector.extract_strided_slice %62 {offsets = [0, 208], sizes = [1, 16], strides = [1, 1]} : vector<1x256xf32> to vector<1x16xf32>
    %89 = arith.addf %87, %88 : vector<1x16xf32>
    %90 = vector.extract_strided_slice %62 {offsets = [0, 224], sizes = [1, 16], strides = [1, 1]} : vector<1x256xf32> to vector<1x16xf32>
    %91 = arith.addf %89, %90 : vector<1x16xf32>
    %92 = vector.extract_strided_slice %62 {offsets = [0, 240], sizes = [1, 16], strides = [1, 1]} : vector<1x256xf32> to vector<1x16xf32>
    %93 = arith.addf %91, %92 : vector<1x16xf32>
    %cst_44 = arith.constant 3.906250e-03 : f32
    %94 = vector.broadcast %cst_44 : f32 to vector<1x16xf32>
    %95 = arith.mulf %93, %94 : vector<1x16xf32>
    %c0_45 = arith.constant 0 : index
    %c0_46 = arith.constant 0 : index
    %96 = vector.load %arg8[%c0_45, %c0_46] : memref<2x16xf32, #tpu.memory_space<vmem>>, vector<2x16xf32>
    %97 = vector.broadcast %95 : vector<1x16xf32> to vector<2x16xf32>
    %98 = arith.mulf %97, %96 : vector<2x16xf32>
    %cst_47 = arith.constant dense<0.000000e+00> : vector<2xf32>
    %99 = vector.multi_reduction <add>, %98, %cst_47 [1] : vector<2x16xf32> to vector<2xf32>
    %100 = vector.shape_cast %99 : vector<2xf32> to vector<2x1xf32>
    %c0_48 = arith.constant 0 : index
    %c0_49 = arith.constant 0 : index
    %101 = vector.load %arg9[%c0_48, %c0_49] : memref<2x1xf32, #tpu.memory_space<vmem>>, vector<2x1xf32>
    %102 = arith.addf %100, %101 : vector<2x1xf32>
    %cst_50 = arith.constant 0.000000e+00 : f32
    %103 = vector.broadcast %cst_50 : f32 to vector<2x1xf32>
    %104 = arith.maximumf %102, %103 : vector<2x1xf32>
    %c0_51 = arith.constant 0 : index
    %c0_52 = arith.constant 0 : index
    %105 = vector.load %arg10[%c0_51, %c0_52] : memref<2x256xf32, #tpu.memory_space<vmem>>, vector<2x256xf32>
    %106 = vector.broadcast %104 : vector<2x1xf32> to vector<2x256xf32>
    %107 = arith.mulf %106, %105 : vector<2x256xf32>
    %cst_53 = arith.constant dense<0.000000e+00> : vector<256xf32>
    %108 = vector.multi_reduction <add>, %107, %cst_53 [0] : vector<2x256xf32> to vector<256xf32>
    %109 = vector.shape_cast %108 : vector<256xf32> to vector<1x256xf32>
    %c0_54 = arith.constant 0 : index
    %c0_55 = arith.constant 0 : index
    %110 = vector.load %arg11[%c0_54, %c0_55] : memref<1x256xf32, #tpu.memory_space<vmem>>, vector<1x256xf32>
    %111 = arith.addf %109, %110 : vector<1x256xf32>
    %112 = arith.negf %111 : vector<1x256xf32>
    %113 = math.exp %112 : vector<1x256xf32>
    %cst_56 = arith.constant 1.000000e+00 : f32
    %114 = vector.broadcast %cst_56 : f32 to vector<1x256xf32>
    %115 = arith.addf %114, %113 : vector<1x256xf32>
    %116 = arith.divf %114, %115 : vector<1x256xf32>
    %117 = vector.broadcast %116 : vector<1x256xf32> to vector<16x256xf32>
    %118 = arith.mulf %60, %117 : vector<16x256xf32>
    %119 = arith.addf %118, %1 : vector<16x256xf32>
    %c0_57 = arith.constant 0 : index
    %c0_58 = arith.constant 0 : index
    %c0_59 = arith.constant 0 : index
    %120 = vector.load %arg12[%c0_57, %c0_58, %c0_59] : memref<1x16x256xf32, #tpu.memory_space<vmem>>, vector<1x16x256xf32>
    %121 = vector.shape_cast %120 : vector<1x16x256xf32> to vector<16x256xf32>
    %122 = vector.shape_cast %119 : vector<16x256xf32> to vector<1x16x256xf32>
    tpu.vector_store %arg12[%c0_57, %c0_58, %c0_59], %122 {strides = array<i32>} : memref<1x16x256xf32, #tpu.memory_space<vmem>>, vector<1x16x256xf32>,
    return
  }
  func.func @transform_0(%arg0: i32) -> (i32, i32, i32) {
    %c0_i32 = arith.constant 0 : i32
    %c0_i32_0 = arith.constant 0 : i32
    %c0_i32_1 = arith.constant 0 : i32
    return %arg0, %c0_i32, %c0_i32_0 : i32, i32, i32
  }
  func.func @transform_1(%arg0: i32) -> (i32, i32, i32) {
    %c0_i32 = arith.constant 0 : i32
    %c0_i32_0 = arith.constant 0 : i32
    %c0_i32_1 = arith.constant 0 : i32
    %c0_i32_2 = arith.constant 0 : i32
    return %c0_i32, %c0_i32_0, %c0_i32_1 : i32, i32, i32
  }
  func.func @transform_2(%arg0: i32) -> (i32, i32) {
    %c0_i32 = arith.constant 0 : i32
    %c0_i32_0 = arith.constant 0 : i32
    %c0_i32_1 = arith.constant 0 : i32
    return %c0_i32, %c0_i32_0 : i32, i32
  }
  func.func @transform_3(%arg0: i32) -> (i32, i32) {
    %c0_i32 = arith.constant 0 : i32
    %c0_i32_0 = arith.constant 0 : i32
    %c0_i32_1 = arith.constant 0 : i32
    return %c0_i32, %c0_i32_0 : i32, i32
  }
  func.func @transform_4(%arg0: i32) -> (i32, i32, i32) {
    %c0_i32 = arith.constant 0 : i32
    %c0_i32_0 = arith.constant 0 : i32
    %c0_i32_1 = arith.constant 0 : i32
    %c0_i32_2 = arith.constant 0 : i32
    return %c0_i32, %c0_i32_0, %c0_i32_1 : i32, i32, i32
  }
  func.func @transform_5(%arg0: i32) -> (i32, i32) {
    %c0_i32 = arith.constant 0 : i32
    %c0_i32_0 = arith.constant 0 : i32
    %c0_i32_1 = arith.constant 0 : i32
    return %c0_i32, %c0_i32_0 : i32, i32
  }
  func.func @transform_6(%arg0: i32) -> (i32, i32) {
    %c0_i32 = arith.constant 0 : i32
    %c0_i32_0 = arith.constant 0 : i32
    %c0_i32_1 = arith.constant 0 : i32
    return %c0_i32, %c0_i32_0 : i32, i32
  }
  func.func @transform_7(%arg0: i32) -> (i32, i32) {
    %c0_i32 = arith.constant 0 : i32
    %c0_i32_0 = arith.constant 0 : i32
    %c0_i32_1 = arith.constant 0 : i32
    return %c0_i32, %c0_i32_0 : i32, i32
  }
  func.func @transform_8(%arg0: i32) -> (i32, i32) {
    %c0_i32 = arith.constant 0 : i32
    %c0_i32_0 = arith.constant 0 : i32
    %c0_i32_1 = arith.constant 0 : i32
    return %c0_i32, %c0_i32_0 : i32, i32
  }
  func.func @transform_9(%arg0: i32) -> (i32, i32) {
    %c0_i32 = arith.constant 0 : i32
    %c0_i32_0 = arith.constant 0 : i32
    %c0_i32_1 = arith.constant 0 : i32
    return %c0_i32, %c0_i32_0 : i32, i32
  }
  func.func @transform_10(%arg0: i32) -> (i32, i32) {
    %c0_i32 = arith.constant 0 : i32
    %c0_i32_0 = arith.constant 0 : i32
    %c0_i32_1 = arith.constant 0 : i32
    return %c0_i32, %c0_i32_0 : i32, i32
  }
  func.func @transform_11(%arg0: i32) -> (i32, i32, i32) {
    %c0_i32 = arith.constant 0 : i32
    %c0_i32_0 = arith.constant 0 : i32
    %c0_i32_1 = arith.constant 0 : i32
    return %arg0, %c0_i32, %c0_i32_0 : i32, i32, i32
  }
}

</mosaic_0001>

<llo_original>
// kernel: tpu_custom_call.1
$region0: #{tpu_custom_call.1}
  #allocation0 [shape = 'u32[]', space=smem, size = 0x4, offset = 0x4, fixed_abs, tag = 'smem constant byte address 0x4 - core index']
  #allocation1 [shape = 'u32[72,128]{1,0:T(1,128)}', space=vmem, size = 0x9000, scoped, tag = 'internal scratch']
  %s0 = inlined_call_operand.hbm [shape: f32[2,16,256], index: 0, kind: input, shape index: {}, may-alias: {0,11}]
  %s1 = inlined_call_operand.hbm [shape: f32[3,256,256], index: 1, kind: input, shape index: {}]
  %s2 = inlined_call_operand.vmem [shape: f32[1,256], index: 2, kind: input, shape index: {}]
  %s3 = inlined_call_operand.vmem [shape: f32[1,256], index: 3, kind: input, shape index: {}]
  %s4 = inlined_call_operand.hbm [shape: f32[3,256,256], index: 4, kind: input, shape index: {}]
  %s5 = inlined_call_operand.vmem [shape: f32[1,256], index: 5, kind: input, shape index: {}]
  %s6 = inlined_call_operand.vmem [shape: f32[1,256], index: 6, kind: input, shape index: {}]
  %s7 = inlined_call_operand.vmem [shape: f32[2,16], index: 7, kind: input, shape index: {}]
  %s8 = inlined_call_operand.vmem [shape: f32[2,1], index: 8, kind: input, shape index: {}]
  %s9 = inlined_call_operand.vmem [shape: f32[2,256], index: 9, kind: input, shape index: {}]
  %s10 = inlined_call_operand.vmem [shape: f32[1,256], index: 10, kind: input, shape index: {}]
  %s11 = inlined_call_operand.hbm [shape: f32[2,16,256], index: 11, kind: output, shape index: {}, may-alias: {0,11}]
  %s12 = sld [smem:[#allocation0]]
  $region89: #{tpu_custom_call.1} parent=0
    _
  %s14 = ssub.s32 1, %s12
  %s15 = scalar_select 0, %s14, %s12
  $region1: #{tpu_custom_call.1} parent=0
    #allocation2 [shape = 'u8[32768]{0}', space=vmem, size = 0x8000, scoped, tag = 'input window, operand 0']
    #allocation3 [shape = 's32[2]{0}', space=sflag, size = 0x8, scoped, tag = 'scoped memory for tpu_custom_call.1']
    #allocation4 [shape = 's32[2]{0}', space=sflag, size = 0x8, scoped, tag = 'scoped memory for tpu_custom_call.1']
    #allocation5 [shape = 'u8[786432]{0}', space=vmem, size = 0xc0000, scoped, tag = 'input window, operand 1, single buffered']
    #allocation6 [shape = 's32[1]{0}', space=sflag, size = 0x4, scoped, tag = 'scoped memory for tpu_custom_call.1']
    #allocation7 [shape = 'u8[786432]{0}', space=vmem, size = 0xc0000, scoped, tag = 'input window, operand 4, single buffered']
    #allocation8 [shape = 'u8[32768]{0}', space=vmem, size = 0x8000, scoped, tag = 'output window, operand 0']
    %16 = vsyncpa [#allocation3], 0
    %s17 = scalar_lea.sflag [#allocation3], 1
    %18 = vsyncpa %s17, 0
    %19 = vsyncpa [#allocation6], 0
    %20 = vsyncpa [#allocation4], 0
    %s21 = scalar_lea.sflag [#allocation4], 1
    %22 = vsyncpa %s21, 0
    loop: start=0, step=1, limit=4
    $region2: #{tpu_custom_call.1} parent=1 // loop_pre_header
      _
    $region3: #{tpu_custom_call.1} parent=1 // loop_header
      %s24 = sphi 0, %s28
      %p25 = scmp.ge.s32.totalorder %s24, 4
      %s34 = sphi 0, %s36
      %s37 = sphi 0, %s34
      %s38 = sphi 0, %s37
      %s54 = sphi 0, %s38
      %s58 = sphi 0, %s58
      %s60 = sphi 0, %s58
      %s61 = sphi 0, %s60
      %s75 = sphi 0, %s61
      %s79 = sphi 0, %s79
      %s81 = sphi 0, %s79
      %s82 = sphi 0, %s81
      %s96 = sphi 0, %s82
      %s100 = sphi 0, %s100
      %s102 = sphi 0, %s100
      %s103 = sphi 0, %s102
      %s117 = sphi 0, %s103
      %s121 = sphi 0, %s121
      %s123 = sphi 0, %s121
      %s124 = sphi 0, %s123
      %s138 = sphi 0, %s124
      %s142 = sphi 0, %s142
      %s144 = sphi 0, %s142
      %s145 = sphi 0, %s144
      %s159 = sphi 0, %s145
      %s163 = sphi 0, %s163
      %s165 = sphi 0, %s163
      %s166 = sphi 0, %s165
      %s180 = sphi 0, %s166
      %s184 = sphi 0, %s184
      %s186 = sphi 0, %s184
      %s187 = sphi 0, %s186
      %s201 = sphi 0, %s187
      %s205 = sphi 0, %s205
      %s207 = sphi 0, %s205
      %s208 = sphi 0, %s207
      %s222 = sphi 0, %s208
      %s226 = sphi 0, %s226
      %s228 = sphi 0, %s226
      %s229 = sphi 0, %s228
      %s243 = sphi 0, %s229
      %s247 = sphi 0, %s247
      %s249 = sphi 0, %s247
      %s250 = sphi 0, %s249
      %s264 = sphi 0, %s250
      %s270 = sphi 0, %s272
      %s273 = sphi 0, %s270
      %s274 = sphi 0, %s273
      %s290 = sphi 0, %s274
    $region4: #{tpu_custom_call.1} parent=1 // loop_header_branch
      %27 = sbr.rel (%p25) target = $region8
    $region5: #{tpu_custom_call.1} parent=1 // loop_body
      %s29 = ssub.s32 %s24, 1
      %s30 = ssub.s32 %s24, 2
      %s31 = sadd.s32 %s24, 1
      %s32 = ssub.s32 %s24, %s31
      %p33 = scmp.eq.s32.totalorder %s32, 0
      %s35 = sadd.s32 %s34, 1
      %s36 = scalar_select %p33, %s34, %s35
      %p39 = pneg %p33
      %p40 = scmp.eq.s32.totalorder %s24, 1
      %p41 = por %p39, %p40
      %p42 = scmp.ne.s32.totalorder %s34, %s37
      %p43 = scmp.eq.s32.totalorder %s24, 0
      %p44 = por %p42, %p43
      %p45 = scmp.ne.s32.totalorder %s34, %s37
      %p46 = scmp.eq.s32.totalorder %s29, 1
      %p47 = por %p45, %p46
      %p48 = scmp.ne.s32.totalorder %s37, %s38
      %p49 = scmp.eq.s32.totalorder %s29, 0
      %p50 = por %p48, %p49
      %p51 = scmp.ne.s32.totalorder %s37, %s38
      %p52 = scmp.eq.s32.totalorder %s30, 1
      %p53 = por %p51, %p52
      %p55 = scmp.ne.s32.totalorder %s38, %s54
      %p56 = scmp.eq.s32.totalorder %s30, 0
      %p57 = por %p55, %p56
      %s59 = sadd.s32 %s58, 1
      %p62 = scmp.eq.s32.totalorder %s24, 1
      %p63 = scmp.ne.s32.totalorder %s58, %s60
      %p64 = scmp.eq.s32.totalorder %s24, 0
      %p65 = por %p63, %p64
      %p66 = scmp.ne.s32.totalorder %s58, %s60
      %p67 = scmp.eq.s32.totalorder %s29, 1
      %p68 = por %p66, %p67
      %p69 = scmp.ne.s32.totalorder %s60, %s61
      %p70 = scmp.eq.s32.totalorder %s29, 0
      %p71 = por %p69, %p70
      %p72 = scmp.ne.s32.totalorder %s60, %s61
      %p73 = scmp.eq.s32.totalorder %s30, 1
      %p74 = por %p72, %p73
      %p76 = scmp.ne.s32.totalorder %s61, %s75
      %p77 = scmp.eq.s32.totalorder %s30, 0
      %p78 = por %p76, %p77
      %s80 = sadd.s32 %s79, 1
      %p83 = scmp.eq.s32.totalorder %s24, 1
      %p84 = scmp.ne.s32.totalorder %s79, %s81
      %p85 = scmp.eq.s32.totalorder %s24, 0
      %p86 = por %p84, %p85
      %p87 = scmp.ne.s32.totalorder %s79, %s81
      %p88 = scmp.eq.s32.totalorder %s29, 1
      %p89 = por %p87, %p88
      %p90 = scmp.ne.s32.totalorder %s81, %s82
      %p91 = scmp.eq.s32.totalorder %s29, 0
      %p92 = por %p90, %p91
      %p93 = scmp.ne.s32.totalorder %s81, %s82
      %p94 = scmp.eq.s32.totalorder %s30, 1
      %p95 = por %p93, %p94
      %p97 = scmp.ne.s32.totalorder %s82, %s96
      %p98 = scmp.eq.s32.totalorder %s30, 0
      %p99 = por %p97, %p98
      %s101 = sadd.s32 %s100, 1
      %p104 = scmp.eq.s32.totalorder %s24, 1
      %p105 = scmp.ne.s32.totalorder %s100, %s102
      %p106 = scmp.eq.s32.totalorder %s24, 0
      %p107 = por %p105, %p106
      %p108 = scmp.ne.s32.totalorder %s100, %s102
      %p109 = scmp.eq.s32.totalorder %s29, 1
      %p110 = por %p108, %p109
      %p111 = scmp.ne.s32.totalorder %s102, %s103
      %p112 = scmp.eq.s32.totalorder %s29, 0
      %p113 = por %p111, %p112
      %p114 = scmp.ne.s32.totalorder %s102, %s103
      %p115 = scmp.eq.s32.totalorder %s30, 1
      %p116 = por %p114, %p115
      %p118 = scmp.ne.s32.totalorder %s103, %s117
      %p119 = scmp.eq.s32.totalorder %s30, 0
      %p120 = por %p118, %p119
      %s122 = sadd.s32 %s121, 1
      %p125 = scmp.eq.s32.totalorder %s24, 1
      %p126 = scmp.ne.s32.totalorder %s121, %s123
      %p127 = scmp.eq.s32.totalorder %s24, 0
      %p128 = por %p126, %p127
      %p129 = scmp.ne.s32.totalorder %s121, %s123
      %p130 = scmp.eq.s32.totalorder %s29, 1
      %p131 = por %p129, %p130
      %p132 = scmp.ne.s32.totalorder %s123, %s124
      %p133 = scmp.eq.s32.totalorder %s29, 0
      %p134 = por %p132, %p133
      %p135 = scmp.ne.s32.totalorder %s123, %s124
      %p136 = scmp.eq.s32.totalorder %s30, 1
      %p137 = por %p135, %p136
      %p139 = scmp.ne.s32.totalorder %s124, %s138
      %p140 = scmp.eq.s32.totalorder %s30, 0
      %p141 = por %p139, %p140
      %s143 = sadd.s32 %s142, 1
      %p146 = scmp.eq.s32.totalorder %s24, 1
      %p147 = scmp.ne.s32.totalorder %s142, %s144
      %p148 = scmp.eq.s32.totalorder %s24, 0
      %p149 = por %p147, %p148
      %p150 = scmp.ne.s32.totalorder %s142, %s144
      %p151 = scmp.eq.s32.totalorder %s29, 1
      %p152 = por %p150, %p151
      %p153 = scmp.ne.s32.totalorder %s144, %s145
      %p154 = scmp.eq.s32.totalorder %s29, 0
      %p155 = por %p153, %p154
      %p156 = scmp.ne.s32.totalorder %s144, %s145
      %p157 = scmp.eq.s32.totalorder %s30, 1
      %p158 = por %p156, %p157
      %p160 = scmp.ne.s32.totalorder %s145, %s159
      %p161 = scmp.eq.s32.totalorder %s30, 0
      %p162 = por %p160, %p161
      %s164 = sadd.s32 %s163, 1
      %p167 = scmp.eq.s32.totalorder %s24, 1
      %p168 = scmp.ne.s32.totalorder %s163, %s165
      %p169 = scmp.eq.s32.totalorder %s24, 0
      %p170 = por %p168, %p169
      %p171 = scmp.ne.s32.totalorder %s163, %s165
      %p172 = scmp.eq.s32.totalorder %s29, 1
      %p173 = por %p171, %p172
      %p174 = scmp.ne.s32.totalorder %s165, %s166
      %p175 = scmp.eq.s32.totalorder %s29, 0
      %p176 = por %p174, %p175
      %p177 = scmp.ne.s32.totalorder %s165, %s166
      %p178 = scmp.eq.s32.totalorder %s30, 1
      %p179 = por %p177, %p178
      %p181 = scmp.ne.s32.totalorder %s166, %s180
      %p182 = scmp.eq.s32.totalorder %s30, 0
      %p183 = por %p181, %p182
      %s185 = sadd.s32 %s184, 1
      %p188 = scmp.eq.s32.totalorder %s24, 1
      %p189 = scmp.ne.s32.totalorder %s184, %s186
      %p190 = scmp.eq.s32.totalorder %s24, 0
      %p191 = por %p189, %p190
      %p192 = scmp.ne.s32.totalorder %s184, %s186
      %p193 = scmp.eq.s32.totalorder %s29, 1
      %p194 = por %p192, %p193
      %p195 = scmp.ne.s32.totalorder %s186, %s187
      %p196 = scmp.eq.s32.totalorder %s29, 0
      %p197 = por %p195, %p196
      %p198 = scmp.ne.s32.totalorder %s186, %s187
      %p199 = scmp.eq.s32.totalorder %s30, 1
      %p200 = por %p198, %p199
      %p202 = scmp.ne.s32.totalorder %s187, %s201
      %p203 = scmp.eq.s32.totalorder %s30, 0
      %p204 = por %p202, %p203
      %s206 = sadd.s32 %s205, 1
      %p209 = scmp.eq.s32.totalorder %s24, 1
      %p210 = scmp.ne.s32.totalorder %s205, %s207
      %p211 = scmp.eq.s32.totalorder %s24, 0
      %p212 = por %p210, %p211
      %p213 = scmp.ne.s32.totalorder %s205, %s207
      %p214 = scmp.eq.s32.totalorder %s29, 1
      %p215 = por %p213, %p214
      %p216 = scmp.ne.s32.totalorder %s207, %s208
      %p217 = scmp.eq.s32.totalorder %s29, 0
      %p218 = por %p216, %p217
      %p219 = scmp.ne.s32.totalorder %s207, %s208
      %p220 = scmp.eq.s32.totalorder %s30, 1
      %p221 = por %p219, %p220
      %p223 = scmp.ne.s32.totalorder %s208, %s222
      %p224 = scmp.eq.s32.totalorder %s30, 0
      %p225 = por %p223, %p224
      %s227 = sadd.s32 %s226, 1
      %p230 = scmp.eq.s32.totalorder %s24, 1
      %p231 = scmp.ne.s32.totalorder %s226, %s228
      %p232 = scmp.eq.s32.totalorder %s24, 0
      %p233 = por %p231, %p232
      %p234 = scmp.ne.s32.totalorder %s226, %s228
      %p235 = scmp.eq.s32.totalorder %s29, 1
      %p236 = por %p234, %p235
      %p237 = scmp.ne.s32.totalorder %s228, %s229
      %p238 = scmp.eq.s32.totalorder %s29, 0
      %p239 = por %p237, %p238
      %p240 = scmp.ne.s32.totalorder %s228, %s229
      %p241 = scmp.eq.s32.totalorder %s30, 1
      %p242 = por %p240, %p241
      %p244 = scmp.ne.s32.totalorder %s229, %s243
      %p245 = scmp.eq.s32.totalorder %s30, 0
      %p246 = por %p244, %p245
      %s248 = sadd.s32 %s247, 1
      %p251 = scmp.eq.s32.totalorder %s24, 1
      %p252 = scmp.ne.s32.totalorder %s247, %s249
      %p253 = scmp.eq.s32.totalorder %s24, 0
      %p254 = por %p252, %p253
      %p255 = scmp.ne.s32.totalorder %s247, %s249
      %p256 = scmp.eq.s32.totalorder %s29, 1
      %p257 = por %p255, %p256
      %p258 = scmp.ne.s32.totalorder %s249, %s250
      %p259 = scmp.eq.s32.totalorder %s29, 0
      %p260 = por %p258, %p259
      %p261 = scmp.ne.s32.totalorder %s249, %s250
      %p262 = scmp.eq.s32.totalorder %s30, 1
      %p263 = por %p261, %p262
      %p265 = scmp.ne.s32.totalorder %s250, %s264
      %p266 = scmp.eq.s32.totalorder %s30, 0
      %p267 = por %p265, %p266
      %s268 = ssub.s32 %s24, %s31
      %p269 = scmp.eq.s32.totalorder %s268, 0
      %s271 = sadd.s32 %s270, 1
      %s272 = scalar_select %p269, %s270, %s271
      %p275 = pneg %p269
      %p276 = scmp.eq.s32.totalorder %s24, 1
      %p277 = por %p275, %p276
      %p278 = scmp.ne.s32.totalorder %s270, %s273
      %p279 = scmp.eq.s32.totalorder %s24, 0
      %p280 = por %p278, %p279
      %p281 = scmp.ne.s32.totalorder %s270, %s273
      %p282 = scmp.eq.s32.totalorder %s29, 1
      %p283 = por %p281, %p282
      %p284 = scmp.ne.s32.totalorder %s273, %s274
      %p285 = scmp.eq.s32.totalorder %s29, 0
      %p286 = por %p284, %p285
      %p287 = scmp.ne.s32.totalorder %s273, %s274
      %p288 = scmp.eq.s32.totalorder %s30, 1
      %p289 = por %p287, %p288
      %p291 = scmp.ne.s32.totalorder %s274, %s290
      %p292 = scmp.eq.s32.totalorder %s30, 0
      %p293 = por %p291, %p292
      %p294 = scmp.le.s32.totalorder 1, %s24
      %p295 = scmp.lt.s32.totalorder %s24, 3
      %p296 = pnand %p294, %p295
      %p297 = pneg %p296
      // Predicated region
      $region9: #{tpu_custom_call.1} parent=5 // pred_check
        _
      $region10: #{tpu_custom_call.1} parent=5 // pred_check_branch
        %299 = sbr.rel (%p296) target = $region12
      $region11: #{tpu_custom_call.1} parent=5 // pred_region
        %s300 = ssub.s32 %s24, 1
        // Predicated region
        $region13: #{tpu_custom_call.1} parent=11 // pred_check
          %p301 = pneg %p71
        $region14: #{tpu_custom_call.1} parent=11 // pred_check_branch
          %303 = sbr.rel (%p301) target = $region16
        $region15: #{tpu_custom_call.1} parent=11 // pred_region
          %305 = vsyncadd [#allocation6], 0
          %s306 = sshll.u32 %s1, 4
          %s307 = int_to_ptr.hbm [resolvable:$true] %s306
          %s308 = sshll.u32 [#allocation5], 4
          %s309 = int_to_ptr.vmem [resolvable:$true] %s308
          %314 = dma.hbm_to_vmem [thread:$0]  %s307, 24576, %s309, [#allocation6], 256, 256, 16
        $region16: #{tpu_custom_call.1} parent=11 // pred_fallthru
          _
        // Predicated region
        $region17: #{tpu_custom_call.1} parent=11 // pred_check
          %p315 = pneg %p92
        $region18: #{tpu_custom_call.1} parent=11 // pred_check_branch
          %317 = sbr.rel (%p315) target = $region20
        $region19: #{tpu_custom_call.1} parent=11 // pred_region
          _
        $region20: #{tpu_custom_call.1} parent=11 // pred_fallthru
          _
        // Predicated region
        $region21: #{tpu_custom_call.1} parent=11 // pred_check
          %p318 = pneg %p113
        $region22: #{tpu_custom_call.1} parent=11 // pred_check_branch
          %320 = sbr.rel (%p318) target = $region24
        $region23: #{tpu_custom_call.1} parent=11 // pred_region
          _
        $region24: #{tpu_custom_call.1} parent=11 // pred_fallthru
          _
        // Predicated region
        $region25: #{tpu_custom_call.1} parent=11 // pred_check
          %p321 = pneg %p134
        $region26: #{tpu_custom_call.1} parent=11 // pred_check_branch
          %323 = sbr.rel (%p321) target = $region28
        $region27: #{tpu_custom_call.1} parent=11 // pred_region
          %325 = vsyncadd [#allocation6], 0
          %s326 = sshll.u32 %s4, 4
          %s327 = int_to_ptr.hbm [resolvable:$true] %s326
          %s328 = sshll.u32 [#allocation7], 4
          %s329 = int_to_ptr.vmem [resolvable:$true] %s328
          %334 = dma.hbm_to_vmem [thread:$0]  %s327, 24576, %s329, [#allocation6], 256, 256, 16
        $region28: #{tpu_custom_call.1} parent=11 // pred_fallthru
          _
        // Predicated region
        $region29: #{tpu_custom_call.1} parent=11 // pred_check
          %p335 = pneg %p155
        $region30: #{tpu_custom_call.1} parent=11 // pred_check_branch
          %337 = sbr.rel (%p335) target = $region32
        $region31: #{tpu_custom_call.1} parent=11 // pred_region
          _
        $region32: #{tpu_custom_call.1} parent=11 // pred_fallthru
          _
        // Predicated region
        $region33: #{tpu_custom_call.1} parent=11 // pred_check
          %p338 = pneg %p176
        $region34: #{tpu_custom_call.1} parent=11 // pred_check_branch
          %340 = sbr.rel (%p338) target = $region36
        $region35: #{tpu_custom_call.1} parent=11 // pred_region
          _
        $region36: #{tpu_custom_call.1} parent=11 // pred_fallthru
          _
        // Predicated region
        $region37: #{tpu_custom_call.1} parent=11 // pred_check
          %p341 = pneg %p197
        $region38: #{tpu_custom_call.1} parent=11 // pred_check_branch
          %343 = sbr.rel (%p341) target = $region40
        $region39: #{tpu_custom_call.1} parent=11 // pred_region
          _
        $region40: #{tpu_custom_call.1} parent=11 // pred_fallthru
          _
        // Predicated region
        $region41: #{tpu_custom_call.1} parent=11 // pred_check
          %p344 = pneg %p218
        $region42: #{tpu_custom_call.1} parent=11 // pred_check_branch
          %346 = sbr.rel (%p344) target = $region44
        $region43: #{tpu_custom_call.1} parent=11 // pred_region
          _
        $region44: #{tpu_custom_call.1} parent=11 // pred_fallthru
          _
        // Predicated region
        $region45: #{tpu_custom_call.1} parent=11 // pred_check
          %p347 = pneg %p239
        $region46: #{tpu_custom_call.1} parent=11 // pred_check_branch
          %349 = sbr.rel (%p347) target = $region48
        $region47: #{tpu_custom_call.1} parent=11 // pred_region
          _
        $region48: #{tpu_custom_call.1} parent=11 // pred_fallthru
          _
        // Predicated region
        $region49: #{tpu_custom_call.1} parent=11 // pred_check
          %p350 = pneg %p260
        $region50: #{tpu_custom_call.1} parent=11 // pred_check_branch
          %352 = sbr.rel (%p350) target = $region52
        $region51: #{tpu_custom_call.1} parent=11 // pred_region
          _
        $region52: #{tpu_custom_call.1} parent=11 // pred_fallthru
          _
      $region12: #{tpu_custom_call.1} parent=5 // pred_fallthru
        _
      %p353 = scmp.lt.s32.totalorder %s24, 2
      // Predicated region
      $region53: #{tpu_custom_call.1} parent=5 // pred_check
        %p354 = pneg %p353
      $region54: #{tpu_custom_call.1} parent=5 // pred_check_branch
        %356 = sbr.rel (%p354) target = $region56
      $region55: #{tpu_custom_call.1} parent=5 // pred_region
        // Predicated region
        $region57: #{tpu_custom_call.1} parent=55 // pred_check
          %p357 = pneg %p44
        $region58: #{tpu_custom_call.1} parent=55 // pred_check_branch
          %359 = sbr.rel (%p357) target = $region60
        $region59: #{tpu_custom_call.1} parent=55 // pred_region
          %s360 = sand.u32 %s34, 1
          %s361 = scalar_lea.sflag [#allocation3], %s360
          %s362 = sand.u32 %s34, 1
          %s363 = smul.addr %s362, 32
          %s364 = scalar_lea.vmem [#allocation2], %s363
          %366 = vsyncadd %s361, 0
          %s367 = smul.addr %s24, 4
          %s368 = smul.addr %s367, 8
          %s369 = scalar_lea.hbm %s0, %s368
          %s370 = sshll.u32 %s369, 4
          %s371 = int_to_ptr.hbm [resolvable:$true] %s370
          %s372 = sshll.u32 %s364, 4
          %s373 = int_to_ptr.vmem [resolvable:$true] %s372
          %378 = dma.hbm_to_vmem [thread:$0]  %s371, 512, %s373, %s361, 256, 256, 16
        $region60: #{tpu_custom_call.1} parent=55 // pred_fallthru
          _
      $region56: #{tpu_custom_call.1} parent=5 // pred_fallthru
        _
      %p379 = scmp.le.s32.totalorder 1, %s24
      %p380 = scmp.lt.s32.totalorder %s24, 3
      %p381 = pnand %p379, %p380
      %p382 = pneg %p381
      // Predicated region
      $region61: #{tpu_custom_call.1} parent=5 // pred_check
        _
      $region62: #{tpu_custom_call.1} parent=5 // pred_check_branch
        %384 = sbr.rel (%p381) target = $region64
      $region63: #{tpu_custom_call.1} parent=5 // pred_region
        %s385 = ssub.s32 %s24, 1
        %s386 = sand.u32 %s37, 1
        %s387 = scalar_lea.sflag [#allocation3], %s386
        %s388 = sand.u32 %s37, 1
        %s389 = smul.addr %s388, 32
        %s390 = scalar_lea.vmem [#allocation2], %s389
        // Predicated region
        $region65: #{tpu_custom_call.1} parent=63 // pred_check
          %p391 = pneg %p50
        $region66: #{tpu_custom_call.1} parent=63 // pred_check_branch
          %393 = sbr.rel (%p391) target = $region68
        $region67: #{tpu_custom_call.1} parent=63 // pred_region
          %395 = dma.done %s387, 512
        $region68: #{tpu_custom_call.1} parent=63 // pred_fallthru
          _
        // Predicated region
        $region69: #{tpu_custom_call.1} parent=63 // pred_check
          %p396 = pneg %p71
        $region70: #{tpu_custom_call.1} parent=63 // pred_check_branch
          %398 = sbr.rel (%p396) target = $region72
        $region71: #{tpu_custom_call.1} parent=63 // pred_region
          %400 = dma.done [#allocation6], 24576
        $region72: #{tpu_custom_call.1} parent=63 // pred_fallthru
          _
        // Predicated region
        $region73: #{tpu_custom_call.1} parent=63 // pred_check
          %p401 = pneg %p134
        $region74: #{tpu_custom_call.1} parent=63 // pred_check_branch
          %403 = sbr.rel (%p401) target = $region76
        $region75: #{tpu_custom_call.1} parent=63 // pred_region
          %405 = dma.done [#allocation6], 24576
        $region76: #{tpu_custom_call.1} parent=63 // pred_fallthru
          _
        %s406 = sand.u32 %s37, 1
        %s407 = scalar_lea.sflag [#allocation3], %s406
        %s408 = sand.u32 %s37, 1
        %s409 = smul.addr %s408, 32
        %s410 = scalar_lea.vmem [#allocation2], %s409
        %p411 = pneg %p50
        %p412 = pneg %p47
        %p413 = pneg %p71
        %p414 = pneg %p68
        %p415 = pneg %p92
        %p416 = pneg %p89
        %p417 = pneg %p113
        %p418 = pneg %p110
        %p419 = pneg %p134
        %p420 = pneg %p131
        %p421 = pneg %p155
        %p422 = pneg %p152
        %p423 = pneg %p176
        %p424 = pneg %p173
        %p425 = pneg %p197
        %p426 = pneg %p194
        %p427 = pneg %p218
        %p428 = pneg %p215
        %p429 = pneg %p239
        %p430 = pneg %p236
        %p431 = pneg %p260
        %p432 = pneg %p257
        %p433 = pneg %p286
        %p434 = pneg %p283
        %s435 = sand.u32 %s273, 1
        %s436 = scalar_lea.sflag [#allocation4], %s435
        %s437 = sand.u32 %s273, 1
        %s438 = smul.addr %s437, 32
        %s439 = scalar_lea.vmem [#allocation8], %s438
        %v440 = vld [vmem:[%s390] sm:$0xff]
        %v441 = vld [vmem:[%s390 + $0x8] sm:$0xff]
        %v442 = vld [vmem:[%s390 + $0x10] sm:$0xff]
        %v443 = vld [vmem:[%s390 + $0x18] sm:$0xff]
        %v444 = vlaneseq
        %v445 = vshrl.u32 %v444, 7
        %v446 = vadd.s32 %v445, 8
        %vm447 = vcmp.ge.s32.totalorder %v445, 1
        %vm448 = vcmp.ge.s32.totalorder %v446, 1
        %v449 = vrot.slane %v440, 7
        %v450 = vrot.slane %v441, 7
        %v451 = vrot.slane %v442, 7
        %v452 = vrot.slane %v443, 7
        %vm453 = vcmp.lt.s32.totalorder %v445, 1
        %v454 = vsel %vm453, %v449, %v451
        %v455 = vsel %vm453, %v450, %v452
        %v456 = vsel %vm453, %v451, %v449
        %v457 = vsel %vm453, %v452, %v450
        %v458 = vsel %vm447, %v456, 0.0
        %v459 = vsel %vm447, %v457, 0.0
        %v460 = vsel %vm448, %v454, 0.0
        %v461 = vsel %vm448, %v455, 0.0
        %vm462 = vcmp.lt.s32.totalorder %v445, 15
        %vm463 = vcmp.lt.s32.totalorder %v446, 15
        %v464 = vrot.slane %v440, 1
        %v465 = vrot.slane %v441, 1
        %v466 = vrot.slane %v442, 1
        %v467 = vrot.slane %v443, 1
        %vm468 = vcmp.lt.s32.totalorder %v445, 7
        %v469 = vsel %vm468, %v464, %v466
        %v470 = vsel %vm468, %v465, %v467
        %v471 = vsel %vm468, %v466, %v464
        %v472 = vsel %vm468, %v467, %v465
        %v473 = vsel %vm462, %v469, 0.0
        %v474 = vsel %vm462, %v470, 0.0
        %v475 = vsel %vm463, %v471, 0.0
        %v476 = vsel %vm463, %v472, 0.0
        %v477 = vld [vmem:[#allocation5] sm:$0xff]
        %v478 = vld [vmem:[#allocation5 + $0x8] sm:$0xff]
        %v479 = vld [vmem:[#allocation5 + $0x10] sm:$0xff]
        %v480 = vld [vmem:[#allocation5 + $0x18] sm:$0xff]
        %v481 = vld [vmem:[#allocation5 + $0x20] sm:$0xff]
        %v482 = vld [vmem:[#allocation5 + $0x28] sm:$0xff]
        %v483 = vld [vmem:[#allocation5 + $0x30] sm:$0xff]
        %v484 = vld [vmem:[#allocation5 + $0x38] sm:$0xff]
        %v485 = vld [vmem:[#allocation5 + $0x40] sm:$0xff]
        %v486 = vld [vmem:[#allocation5 + $0x48] sm:$0xff]
        %v487 = vld [vmem:[#allocation5 + $0x50] sm:$0xff]
        %v488 = vld [vmem:[#allocation5 + $0x58] sm:$0xff]
        %v489 = vld [vmem:[#allocation5 + $0x60] sm:$0xff]
        %v490 = vld [vmem:[#allocation5 + $0x68] sm:$0xff]
        %v491 = vld [vmem:[#allocation5 + $0x70] sm:$0xff]
        %v492 = vld [vmem:[#allocation5 + $0x78] sm:$0xff]
        %v493 = vld [vmem:[#allocation5 + $0x80] sm:$0xff]
        %v494 = vld [vmem:[#allocation5 + $0x88] sm:$0xff]
        %v495 = vld [vmem:[#allocation5 + $0x90] sm:$0xff]
        %v496 = vld [vmem:[#allocation5 + $0x98] sm:$0xff]
        %v497 = vld [vmem:[#allocation5 + $0xa0] sm:$0xff]
        %v498 = vld [vmem:[#allocation5 + $0xa8] sm:$0xff]
        %v499 = vld [vmem:[#allocation5 + $0xb0] sm:$0xff]
        %v500 = vld [vmem:[#allocation5 + $0xb8] sm:$0xff]
        %v501 = vld [vmem:[#allocation5 + $0xc0] sm:$0xff]
        %v502 = vld [vmem:[#allocation5 + $0xc8] sm:$0xff]
        %v503 = vld [vmem:[#allocation5 + $0xd0] sm:$0xff]
        %v504 = vld [vmem:[#allocation5 + $0xd8] sm:$0xff]
        %v505 = vld [vmem:[#allocation5 + $0xe0] sm:$0xff]
        %v506 = vld [vmem:[#allocation5 + $0xe8] sm:$0xff]
        %v507 = vld [vmem:[#allocation5 + $0xf0] sm:$0xff]
        %v508 = vld [vmem:[#allocation5 + $0xf8] sm:$0xff]
        %v509 = vld [vmem:[#allocation5 + $0x100] sm:$0xff]
        %v510 = vld [vmem:[#allocation5 + $0x108] sm:$0xff]
        %v511 = vld [vmem:[#allocation5 + $0x110] sm:$0xff]
        %v512 = vld [vmem:[#allocation5 + $0x118] sm:$0xff]
        %v513 = vld [vmem:[#allocation5 + $0x120] sm:$0xff]
        %v514 = vld [vmem:[#allocation5 + $0x128] sm:$0xff]
        %v515 = vld [vmem:[#allocation5 + $0x130] sm:$0xff]
        %v516 = vld [vmem:[#allocation5 + $0x138] sm:$0xff]
        %v517 = vld [vmem:[#allocation5 + $0x140] sm:$0xff]
        %v518 = vld [vmem:[#allocation5 + $0x148] sm:$0xff]
        %v519 = vld [vmem:[#allocation5 + $0x150] sm:$0xff]
        %v520 = vld [vmem:[#allocation5 + $0x158] sm:$0xff]
        %v521 = vld [vmem:[#allocation5 + $0x160] sm:$0xff]
        %v522 = vld [vmem:[#allocation5 + $0x168] sm:$0xff]
        %v523 = vld [vmem:[#allocation5 + $0x170] sm:$0xff]
        %v524 = vld [vmem:[#allocation5 + $0x178] sm:$0xff]
        %v525 = vld [vmem:[#allocation5 + $0x180] sm:$0xff]
        %v526 = vld [vmem:[#allocation5 + $0x188] sm:$0xff]
        %v527 = vld [vmem:[#allocation5 + $0x190] sm:$0xff]
        %v528 = vld [vmem:[#allocation5 + $0x198] sm:$0xff]
        %v529 = vld [vmem:[#allocation5 + $0x1a0] sm:$0xff]
        %v530 = vld [vmem:[#allocation5 + $0x1a8] sm:$0xff]
        %v531 = vld [vmem:[#allocation5 + $0x1b0] sm:$0xff]
        %v532 = vld [vmem:[#allocation5 + $0x1b8] sm:$0xff]
        %v533 = vld [vmem:[#allocation5 + $0x1c0] sm:$0xff]
        %v534 = vld [vmem:[#allocation5 + $0x1c8] sm:$0xff]
        %v535 = vld [vmem:[#allocation5 + $0x1d0] sm:$0xff]
        %v536 = vld [vmem:[#allocation5 + $0x1d8] sm:$0xff]
        %v537 = vld [vmem:[#allocation5 + $0x1e0] sm:$0xff]
        %v538 = vld [vmem:[#allocation5 + $0x1e8] sm:$0xff]
        %v539 = vld [vmem:[#allocation5 + $0x1f0] sm:$0xff]
        %v540 = vld [vmem:[#allocation5 + $0x1f8] sm:$0xff]
        %s541 = scalar_lea.vmem [#allocation5], 512
        %v542 = vld [vmem:[%s541] sm:$0xff]
        %v543 = vld [vmem:[%s541 + $0x8] sm:$0xff]
        %v544 = vld [vmem:[%s541 + $0x10] sm:$0xff]
        %v545 = vld [vmem:[%s541 + $0x18] sm:$0xff]
        %v546 = vld [vmem:[%s541 + $0x20] sm:$0xff]
        %v547 = vld [vmem:[%s541 + $0x28] sm:$0xff]
        %v548 = vld [vmem:[%s541 + $0x30] sm:$0xff]
        %v549 = vld [vmem:[%s541 + $0x38] sm:$0xff]
        %v550 = vld [vmem:[%s541 + $0x40] sm:$0xff]
        %v551 = vld [vmem:[%s541 + $0x48] sm:$0xff]
        %v552 = vld [vmem:[%s541 + $0x50] sm:$0xff]
        %v553 = vld [vmem:[%s541 + $0x58] sm:$0xff]
        %v554 = vld [vmem:[%s541 + $0x60] sm:$0xff]
        %v555 = vld [vmem:[%s541 + $0x68] sm:$0xff]
        %v556 = vld [vmem:[%s541 + $0x70] sm:$0xff]
        %v557 = vld [vmem:[%s541 + $0x78] sm:$0xff]
        %v558 = vld [vmem:[%s541 + $0x80] sm:$0xff]
        %v559 = vld [vmem:[%s541 + $0x88] sm:$0xff]
        %v560 = vld [vmem:[%s541 + $0x90] sm:$0xff]
        %v561 = vld [vmem:[%s541 + $0x98] sm:$0xff]
        %v562 = vld [vmem:[%s541 + $0xa0] sm:$0xff]
        %v563 = vld [vmem:[%s541 + $0xa8] sm:$0xff]
        %v564 = vld [vmem:[%s541 + $0xb0] sm:$0xff]
        %v565 = vld [vmem:[%s541 + $0xb8] sm:$0xff]
        %v566 = vld [vmem:[%s541 + $0xc0] sm:$0xff]
        %v567 = vld [vmem:[%s541 + $0xc8] sm:$0xff]
        %v568 = vld [vmem:[%s541 + $0xd0] sm:$0xff]
        %v569 = vld [vmem:[%s541 + $0xd8] sm:$0xff]
        %v570 = vld [vmem:[%s541 + $0xe0] sm:$0xff]
        %v571 = vld [vmem:[%s541 + $0xe8] sm:$0xff]
        %v572 = vld [vmem:[%s541 + $0xf0] sm:$0xff]
        %v573 = vld [vmem:[%s541 + $0xf8] sm:$0xff]
        %v574 = vld [vmem:[%s541 + $0x100] sm:$0xff]
        %v575 = vld [vmem:[%s541 + $0x108] sm:$0xff]
        %v576 = vld [vmem:[%s541 + $0x110] sm:$0xff]
        %v577 = vld [vmem:[%s541 + $0x118] sm:$0xff]
        %v578 = vld [vmem:[%s541 + $0x120] sm:$0xff]
        %v579 = vld [vmem:[%s541 + $0x128] sm:$0xff]
        %v580 = vld [vmem:[%s541 + $0x130] sm:$0xff]
        %v581 = vld [vmem:[%s541 + $0x138] sm:$0xff]
        %v582 = vld [vmem:[%s541 + $0x140] sm:$0xff]
        %v583 = vld [vmem:[%s541 + $0x148] sm:$0xff]
        %v584 = vld [vmem:[%s541 + $0x150] sm:$0xff]
        %v585 = vld [vmem:[%s541 + $0x158] sm:$0xff]
        %v586 = vld [vmem:[%s541 + $0x160] sm:$0xff]
        %v587 = vld [vmem:[%s541 + $0x168] sm:$0xff]
        %v588 = vld [vmem:[%s541 + $0x170] sm:$0xff]
        %v589 = vld [vmem:[%s541 + $0x178] sm:$0xff]
        %v590 = vld [vmem:[%s541 + $0x180] sm:$0xff]
        %v591 = vld [vmem:[%s541 + $0x188] sm:$0xff]
        %v592 = vld [vmem:[%s541 + $0x190] sm:$0xff]
        %v593 = vld [vmem:[%s541 + $0x198] sm:$0xff]
        %v594 = vld [vmem:[%s541 + $0x1a0] sm:$0xff]
        %v595 = vld [vmem:[%s541 + $0x1a8] sm:$0xff]
        %v596 = vld [vmem:[%s541 + $0x1b0] sm:$0xff]
        %v597 = vld [vmem:[%s541 + $0x1b8] sm:$0xff]
        %v598 = vld [vmem:[%s541 + $0x1c0] sm:$0xff]
        %v599 = vld [vmem:[%s541 + $0x1c8] sm:$0xff]
        %v600 = vld [vmem:[%s541 + $0x1d0] sm:$0xff]
        %v601 = vld [vmem:[%s541 + $0x1d8] sm:$0xff]
        %v602 = vld [vmem:[%s541 + $0x1e0] sm:$0xff]
        %v603 = vld [vmem:[%s541 + $0x1e8] sm:$0xff]
        %v604 = vld [vmem:[%s541 + $0x1f0] sm:$0xff]
        %v605 = vld [vmem:[%s541 + $0x1f8] sm:$0xff]
        %606 = vmatpush.msra.mxu0 %v572
        %607 = vmatpush.msra.mxu0 %v570
        %608 = vmatpush.msra.mxu0 %v568
        %609 = vmatpush.msra.mxu0 %v566
        %610 = vmatpush.msra.mxu0 %v564
        %611 = vmatpush.msra.mxu0 %v562
        %612 = vmatpush.msra.mxu0 %v560
        %613 = vmatpush.msra.mxu0 %v558
        %614 = vmatpush.msra.mxu0 %v556
        %615 = vmatpush.msra.mxu0 %v554
        %616 = vmatpush.msra.mxu0 %v552
        %617 = vmatpush.msra.mxu0 %v550
        %618 = vmatpush.msra.mxu0 %v548
        %619 = vmatpush.msra.mxu0 %v546
        %620 = vmatpush.msra.mxu0 %v544
        %621 = vmatpush.msra.mxu0 %v542
        %622 = vmatmul.f32.gmra.mxu0 %v440
        %v623 = vpop.f32.mrf.mxu0
        %v624 = vadd.f32 0.0, %v623
        %625 = vmatmul.f32.gmra.mxu0 %v442
        %v626 = vpop.f32.mrf.mxu0
        %v627 = vadd.f32 0.0, %v626
        %628 = vdwg.mxu0
        %629 = vmatpush.msra.mxu0 %v604
        %630 = vmatpush.msra.mxu0 %v602
        %631 = vmatpush.msra.mxu0 %v600
        %632 = vmatpush.msra.mxu0 %v598
        %633 = vmatpush.msra.mxu0 %v596
        %634 = vmatpush.msra.mxu0 %v594
        %635 = vmatpush.msra.mxu0 %v592
        %636 = vmatpush.msra.mxu0 %v590
        %637 = vmatpush.msra.mxu0 %v588
        %638 = vmatpush.msra.mxu0 %v586
        %639 = vmatpush.msra.mxu0 %v584
        %640 = vmatpush.msra.mxu0 %v582
        %641 = vmatpush.msra.mxu0 %v580
        %642 = vmatpush.msra.mxu0 %v578
        %643 = vmatpush.msra.mxu0 %v576
        %644 = vmatpush.msra.mxu0 %v574
        %645 = vmatmul.f32.gmra.mxu0 %v441
        %v646 = vpop.f32.mrf.mxu0
        %v647 = vadd.f32 %v624, %v646
        %648 = vmatmul.f32.gmra.mxu0 %v443
        %v649 = vpop.f32.mrf.mxu0
        %v650 = vadd.f32 %v627, %v649
        %651 = vdwg.mxu0
        %652 = vmatpush.msra.mxu0 %v573
        %653 = vmatpush.msra.mxu0 %v571
        %654 = vmatpush.msra.mxu0 %v569
        %655 = vmatpush.msra.mxu0 %v567
        %656 = vmatpush.msra.mxu0 %v565
        %657 = vmatpush.msra.mxu0 %v563
        %658 = vmatpush.msra.mxu0 %v561
        %659 = vmatpush.msra.mxu0 %v559
        %660 = vmatpush.msra.mxu0 %v557
        %661 = vmatpush.msra.mxu0 %v555
        %662 = vmatpush.msra.mxu0 %v553
        %663 = vmatpush.msra.mxu0 %v551
        %664 = vmatpush.msra.mxu0 %v549
        %665 = vmatpush.msra.mxu0 %v547
        %666 = vmatpush.msra.mxu0 %v545
        %667 = vmatpush.msra.mxu0 %v543
        %668 = vmatmul.f32.gmra.mxu0 %v440
        %v669 = vpop.f32.mrf.mxu0
        %v670 = vadd.f32 0.0, %v669
        %671 = vmatmul.f32.gmra.mxu0 %v442
        %v672 = vpop.f32.mrf.mxu0
        %v673 = vadd.f32 0.0, %v672
        %674 = vdwg.mxu0
        %675 = vmatpush.msra.mxu0 %v605
        %676 = vmatpush.msra.mxu0 %v603
        %677 = vmatpush.msra.mxu0 %v601
        %678 = vmatpush.msra.mxu0 %v599
        %679 = vmatpush.msra.mxu0 %v597
        %680 = vmatpush.msra.mxu0 %v595
        %681 = vmatpush.msra.mxu0 %v593
        %682 = vmatpush.msra.mxu0 %v591
        %683 = vmatpush.msra.mxu0 %v589
        %684 = vmatpush.msra.mxu0 %v587
        %685 = vmatpush.msra.mxu0 %v585
        %686 = vmatpush.msra.mxu0 %v583
        %687 = vmatpush.msra.mxu0 %v581
        %688 = vmatpush.msra.mxu0 %v579
        %689 = vmatpush.msra.mxu0 %v577
        %690 = vmatpush.msra.mxu0 %v575
        %691 = vmatmul.f32.gmra.mxu0 %v441
        %v692 = vpop.f32.mrf.mxu0
        %v693 = vadd.f32 %v670, %v692
        %694 = vmatmul.f32.gmra.mxu0 %v443
        %v695 = vpop.f32.mrf.mxu0
        %v696 = vadd.f32 %v673, %v695
        %697 = vdwg.mxu0
        %698 = vmatpush.msra.mxu0 %v507
        %699 = vmatpush.msra.mxu0 %v505
        %700 = vmatpush.msra.mxu0 %v503
        %701 = vmatpush.msra.mxu0 %v501
        %702 = vmatpush.msra.mxu0 %v499
        %703 = vmatpush.msra.mxu0 %v497
        %704 = vmatpush.msra.mxu0 %v495
        %705 = vmatpush.msra.mxu0 %v493
        %706 = vmatpush.msra.mxu0 %v491
        %707 = vmatpush.msra.mxu0 %v489
        %708 = vmatpush.msra.mxu0 %v487
        %709 = vmatpush.msra.mxu0 %v485
        %710 = vmatpush.msra.mxu0 %v483
        %711 = vmatpush.msra.mxu0 %v481
        %712 = vmatpush.msra.mxu0 %v479
        %713 = vmatpush.msra.mxu0 %v477
        %714 = vmatmul.f32.gmra.mxu0 %v458
        %v715 = vpop.f32.mrf.mxu0
        %v716 = vadd.f32 %v647, %v715
        %717 = vmatmul.f32.gmra.mxu0 %v460
        %v718 = vpop.f32.mrf.mxu0
        %v719 = vadd.f32 %v650, %v718
        %720 = vdwg.mxu0
        %721 = vmatpush.msra.mxu0 %v539
        %722 = vmatpush.msra.mxu0 %v537
        %723 = vmatpush.msra.mxu0 %v535
        %724 = vmatpush.msra.mxu0 %v533
        %725 = vmatpush.msra.mxu0 %v531
        %726 = vmatpush.msra.mxu0 %v529
        %727 = vmatpush.msra.mxu0 %v527
        %728 = vmatpush.msra.mxu0 %v525
        %729 = vmatpush.msra.mxu0 %v523
        %730 = vmatpush.msra.mxu0 %v521
        %731 = vmatpush.msra.mxu0 %v519
        %732 = vmatpush.msra.mxu0 %v517
        %733 = vmatpush.msra.mxu0 %v515
        %734 = vmatpush.msra.mxu0 %v513
        %735 = vmatpush.msra.mxu0 %v511
        %736 = vmatpush.msra.mxu0 %v509
        %737 = vmatmul.f32.gmra.mxu0 %v459
        %v738 = vpop.f32.mrf.mxu0
        %v739 = vadd.f32 %v716, %v738
        %740 = vmatmul.f32.gmra.mxu0 %v461
        %v741 = vpop.f32.mrf.mxu0
        %v742 = vadd.f32 %v719, %v741
        %743 = vdwg.mxu0
        %744 = vmatpush.msra.mxu0 %v508
        %745 = vmatpush.msra.mxu0 %v506
        %746 = vmatpush.msra.mxu0 %v504
        %747 = vmatpush.msra.mxu0 %v502
        %748 = vmatpush.msra.mxu0 %v500
        %749 = vmatpush.msra.mxu0 %v498
        %750 = vmatpush.msra.mxu0 %v496
        %751 = vmatpush.msra.mxu0 %v494
        %752 = vmatpush.msra.mxu0 %v492
        %753 = vmatpush.msra.mxu0 %v490
        %754 = vmatpush.msra.mxu0 %v488
        %755 = vmatpush.msra.mxu0 %v486
        %756 = vmatpush.msra.mxu0 %v484
        %757 = vmatpush.msra.mxu0 %v482
        %758 = vmatpush.msra.mxu0 %v480
        %759 = vmatpush.msra.mxu0 %v478
        %760 = vmatmul.f32.gmra.mxu0 %v458
        %v761 = vpop.f32.mrf.mxu0
        %v762 = vadd.f32 %v693, %v761
        %763 = vmatmul.f32.gmra.mxu0 %v460
        %v764 = vpop.f32.mrf.mxu0
        %v765 = vadd.f32 %v696, %v764
        %766 = vdwg.mxu0
        %767 = vmatpush.msra.mxu0 %v540
        %768 = vmatpush.msra.mxu0 %v538
        %769 = vmatpush.msra.mxu0 %v536
        %770 = vmatpush.msra.mxu0 %v534
        %771 = vmatpush.msra.mxu0 %v532
        %772 = vmatpush.msra.mxu0 %v530
        %773 = vmatpush.msra.mxu0 %v528
        %774 = vmatpush.msra.mxu0 %v526
        %775 = vmatpush.msra.mxu0 %v524
        %776 = vmatpush.msra.mxu0 %v522
        %777 = vmatpush.msra.mxu0 %v520
        %778 = vmatpush.msra.mxu0 %v518
        %779 = vmatpush.msra.mxu0 %v516
        %780 = vmatpush.msra.mxu0 %v514
        %781 = vmatpush.msra.mxu0 %v512
        %782 = vmatpush.msra.mxu0 %v510
        %783 = vmatmul.f32.gmra.mxu0 %v459
        %v784 = vpop.f32.mrf.mxu0
        %v785 = vadd.f32 %v762, %v784
        %786 = vmatmul.f32.gmra.mxu0 %v461
        %v787 = vpop.f32.mrf.mxu0
        %v788 = vadd.f32 %v765, %v787
        %789 = vdwg.mxu0
        %s790 = scalar_lea.vmem [#allocation5], 1024
        %v791 = vld [vmem:[%s790] sm:$0xff]
        %v792 = vld [vmem:[%s790 + $0x8] sm:$0xff]
        %v793 = vld [vmem:[%s790 + $0x10] sm:$0xff]
        %v794 = vld [vmem:[%s790 + $0x18] sm:$0xff]
        %v795 = vld [vmem:[%s790 + $0x20] sm:$0xff]
        %v796 = vld [vmem:[%s790 + $0x28] sm:$0xff]
        %v797 = vld [vmem:[%s790 + $0x30] sm:$0xff]
        %v798 = vld [vmem:[%s790 + $0x38] sm:$0xff]
        %v799 = vld [vmem:[%s790 + $0x40] sm:$0xff]
        %v800 = vld [vmem:[%s790 + $0x48] sm:$0xff]
        %v801 = vld [vmem:[%s790 + $0x50] sm:$0xff]
        %v802 = vld [vmem:[%s790 + $0x58] sm:$0xff]
        %v803 = vld [vmem:[%s790 + $0x60] sm:$0xff]
        %v804 = vld [vmem:[%s790 + $0x68] sm:$0xff]
        %v805 = vld [vmem:[%s790 + $0x70] sm:$0xff]
        %v806 = vld [vmem:[%s790 + $0x78] sm:$0xff]
        %v807 = vld [vmem:[%s790 + $0x80] sm:$0xff]
        %v808 = vld [vmem:[%s790 + $0x88] sm:$0xff]
        %v809 = vld [vmem:[%s790 + $0x90] sm:$0xff]
        %v810 = vld [vmem:[%s790 + $0x98] sm:$0xff]
        %v811 = vld [vmem:[%s790 + $0xa0] sm:$0xff]
        %v812 = vld [vmem:[%s790 + $0xa8] sm:$0xff]
        %v813 = vld [vmem:[%s790 + $0xb0] sm:$0xff]
        %v814 = vld [vmem:[%s790 + $0xb8] sm:$0xff]
        %v815 = vld [vmem:[%s790 + $0xc0] sm:$0xff]
        %v816 = vld [vmem:[%s790 + $0xc8] sm:$0xff]
        %v817 = vld [vmem:[%s790 + $0xd0] sm:$0xff]
        %v818 = vld [vmem:[%s790 + $0xd8] sm:$0xff]
        %v819 = vld [vmem:[%s790 + $0xe0] sm:$0xff]
        %v820 = vld [vmem:[%s790 + $0xe8] sm:$0xff]
        %v821 = vld [vmem:[%s790 + $0xf0] sm:$0xff]
        %v822 = vld [vmem:[%s790 + $0xf8] sm:$0xff]
        %v823 = vld [vmem:[%s790 + $0x100] sm:$0xff]
        %v824 = vld [vmem:[%s790 + $0x108] sm:$0xff]
        %v825 = vld [vmem:[%s790 + $0x110] sm:$0xff]
        %v826 = vld [vmem:[%s790 + $0x118] sm:$0xff]
        %v827 = vld [vmem:[%s790 + $0x120] sm:$0xff]
        %v828 = vld [vmem:[%s790 + $0x128] sm:$0xff]
        %v829 = vld [vmem:[%s790 + $0x130] sm:$0xff]
        %v830 = vld [vmem:[%s790 + $0x138] sm:$0xff]
        %v831 = vld [vmem:[%s790 + $0x140] sm:$0xff]
        %v832 = vld [vmem:[%s790 + $0x148] sm:$0xff]
        %v833 = vld [vmem:[%s790 + $0x150] sm:$0xff]
        %v834 = vld [vmem:[%s790 + $0x158] sm:$0xff]
        %v835 = vld [vmem:[%s790 + $0x160] sm:$0xff]
        %v836 = vld [vmem:[%s790 + $0x168] sm:$0xff]
        %v837 = vld [vmem:[%s790 + $0x170] sm:$0xff]
        %v838 = vld [vmem:[%s790 + $0x178] sm:$0xff]
        %v839 = vld [vmem:[%s790 + $0x180] sm:$0xff]
        %v840 = vld [vmem:[%s790 + $0x188] sm:$0xff]
        %v841 = vld [vmem:[%s790 + $0x190] sm:$0xff]
        %v842 = vld [vmem:[%s790 + $0x198] sm:$0xff]
        %v843 = vld [vmem:[%s790 + $0x1a0] sm:$0xff]
        %v844 = vld [vmem:[%s790 + $0x1a8] sm:$0xff]
        %v845 = vld [vmem:[%s790 + $0x1b0] sm:$0xff]
        %v846 = vld [vmem:[%s790 + $0x1b8] sm:$0xff]
        %v847 = vld [vmem:[%s790 + $0x1c0] sm:$0xff]
        %v848 = vld [vmem:[%s790 + $0x1c8] sm:$0xff]
        %v849 = vld [vmem:[%s790 + $0x1d0] sm:$0xff]
        %v850 = vld [vmem:[%s790 + $0x1d8] sm:$0xff]
        %v851 = vld [vmem:[%s790 + $0x1e0] sm:$0xff]
        %v852 = vld [vmem:[%s790 + $0x1e8] sm:$0xff]
        %v853 = vld [vmem:[%s790 + $0x1f0] sm:$0xff]
        %v854 = vld [vmem:[%s790 + $0x1f8] sm:$0xff]
        %855 = vmatpush.msra.mxu0 %v821
        %856 = vmatpush.msra.mxu0 %v819
        %857 = vmatpush.msra.mxu0 %v817
        %858 = vmatpush.msra.mxu0 %v815
        %859 = vmatpush.msra.mxu0 %v813
        %860 = vmatpush.msra.mxu0 %v811
        %861 = vmatpush.msra.mxu0 %v809
        %862 = vmatpush.msra.mxu0 %v807
        %863 = vmatpush.msra.mxu0 %v805
        %864 = vmatpush.msra.mxu0 %v803
        %865 = vmatpush.msra.mxu0 %v801
        %866 = vmatpush.msra.mxu0 %v799
        %867 = vmatpush.msra.mxu0 %v797
        %868 = vmatpush.msra.mxu0 %v795
        %869 = vmatpush.msra.mxu0 %v793
        %870 = vmatpush.msra.mxu0 %v791
        %871 = vmatmul.f32.gmra.mxu0 %v473
        %v872 = vpop.f32.mrf.mxu0
        %v873 = vadd.f32 0.0, %v872
        %874 = vmatmul.f32.gmra.mxu0 %v475
        %v875 = vpop.f32.mrf.mxu0
        %v876 = vadd.f32 0.0, %v875
        %877 = vdwg.mxu0
        %878 = vmatpush.msra.mxu0 %v853
        %879 = vmatpush.msra.mxu0 %v851
        %880 = vmatpush.msra.mxu0 %v849
        %881 = vmatpush.msra.mxu0 %v847
        %882 = vmatpush.msra.mxu0 %v845
        %883 = vmatpush.msra.mxu0 %v843
        %884 = vmatpush.msra.mxu0 %v841
        %885 = vmatpush.msra.mxu0 %v839
        %886 = vmatpush.msra.mxu0 %v837
        %887 = vmatpush.msra.mxu0 %v835
        %888 = vmatpush.msra.mxu0 %v833
        %889 = vmatpush.msra.mxu0 %v831
        %890 = vmatpush.msra.mxu0 %v829
        %891 = vmatpush.msra.mxu0 %v827
        %892 = vmatpush.msra.mxu0 %v825
        %893 = vmatpush.msra.mxu0 %v823
        %894 = vmatmul.f32.gmra.mxu0 %v474
        %v895 = vpop.f32.mrf.mxu0
        %v896 = vadd.f32 %v873, %v895
        %897 = vmatmul.f32.gmra.mxu0 %v476
        %v898 = vpop.f32.mrf.mxu0
        %v899 = vadd.f32 %v876, %v898
        %900 = vdwg.mxu0
        %901 = vmatpush.msra.mxu0 %v822
        %902 = vmatpush.msra.mxu0 %v820
        %903 = vmatpush.msra.mxu0 %v818
        %904 = vmatpush.msra.mxu0 %v816
        %905 = vmatpush.msra.mxu0 %v814
        %906 = vmatpush.msra.mxu0 %v812
        %907 = vmatpush.msra.mxu0 %v810
        %908 = vmatpush.msra.mxu0 %v808
        %909 = vmatpush.msra.mxu0 %v806
        %910 = vmatpush.msra.mxu0 %v804
        %911 = vmatpush.msra.mxu0 %v802
        %912 = vmatpush.msra.mxu0 %v800
        %913 = vmatpush.msra.mxu0 %v798
        %914 = vmatpush.msra.mxu0 %v796
        %915 = vmatpush.msra.mxu0 %v794
        %916 = vmatpush.msra.mxu0 %v792
        %917 = vmatmul.f32.gmra.mxu0 %v473
        %v918 = vpop.f32.mrf.mxu0
        %v919 = vadd.f32 0.0, %v918
        %920 = vmatmul.f32.gmra.mxu0 %v475
        %v921 = vpop.f32.mrf.mxu0
        %v922 = vadd.f32 0.0, %v921
        %923 = vdwg.mxu0
        %924 = vmatpush.msra.mxu0 %v854
        %925 = vmatpush.msra.mxu0 %v852
        %926 = vmatpush.msra.mxu0 %v850
        %927 = vmatpush.msra.mxu0 %v848
        %928 = vmatpush.msra.mxu0 %v846
        %929 = vmatpush.msra.mxu0 %v844
        %930 = vmatpush.msra.mxu0 %v842
        %931 = vmatpush.msra.mxu0 %v840
        %932 = vmatpush.msra.mxu0 %v838
        %933 = vmatpush.msra.mxu0 %v836
        %934 = vmatpush.msra.mxu0 %v834
        %935 = vmatpush.msra.mxu0 %v832
        %936 = vmatpush.msra.mxu0 %v830
        %937 = vmatpush.msra.mxu0 %v828
        %938 = vmatpush.msra.mxu0 %v826
        %939 = vmatpush.msra.mxu0 %v824
        %940 = vmatmul.f32.gmra.mxu0 %v474
        %v941 = vpop.f32.mrf.mxu0
        %v942 = vadd.f32 %v919, %v941
        %943 = vmatmul.f32.gmra.mxu0 %v476
        %v944 = vpop.f32.mrf.mxu0
        %v945 = vadd.f32 %v922, %v944
        %946 = vdwg.mxu0
        %v947 = vadd.f32 %v739, %v896
        %v948 = vadd.f32 %v785, %v942
        %v949 = vadd.f32 %v742, %v899
        %v950 = vadd.f32 %v788, %v945
        %v951 = vld [vmem:[%s2] sm:$0x3]
        %v953 = vperm.slane %v951, 0
        %v954 = vperm.slane %v951, 1
        %v957 = vmul.f32 %v947, %v953
        %v958 = vmul.f32 %v948, %v954
        %v959 = vmul.f32 %v949, %v953
        %v960 = vmul.f32 %v950, %v954
        %v961 = vld [vmem:[%s3] sm:$0x3]
        %v963 = vperm.slane %v961, 0
        %v964 = vperm.slane %v961, 1
        %v967 = vadd.f32 %v957, %v963
        %v968 = vadd.f32 %v958, %v964
        %v969 = vadd.f32 %v959, %v963
        %v970 = vadd.f32 %v960, %v964
        %v971 = vmax.f32 %v967, 0.0
        %v972 = vmax.f32 %v968, 0.0
        %v973 = vmax.f32 %v969, 0.0
        %v974 = vmax.f32 %v970, 0.0
        %v975 = vrot.slane %v971, 7
        %v976 = vrot.slane %v972, 7
        %v977 = vrot.slane %v973, 7
        %v978 = vrot.slane %v974, 7
        %v979 = vsel %vm453, %v975, %v977
        %v980 = vsel %vm453, %v976, %v978
        %v981 = vsel %vm453, %v977, %v975
        %v982 = vsel %vm453, %v978, %v976
        %v983 = vsel %vm447, %v981, 0.0
        %v984 = vsel %vm447, %v982, 0.0
        %v985 = vsel %vm448, %v979, 0.0
        %v986 = vsel %vm448, %v980, 0.0
        %v987 = vrot.slane %v971, 1
        %v988 = vrot.slane %v972, 1
        %v989 = vrot.slane %v973, 1
        %v990 = vrot.slane %v974, 1
        %v991 = vsel %vm468, %v987, %v989
        %v992 = vsel %vm468, %v988, %v990
        %v993 = vsel %vm468, %v989, %v987
        %v994 = vsel %vm468, %v990, %v988
        %v995 = vsel %vm462, %v991, 0.0
        %v996 = vsel %vm462, %v992, 0.0
        %v997 = vsel %vm463, %v993, 0.0
        %v998 = vsel %vm463, %v994, 0.0
        %v999 = vld [vmem:[#allocation7] sm:$0xff]
        %v1000 = vld [vmem:[#allocation7 + $0x8] sm:$0xff]
        %v1001 = vld [vmem:[#allocation7 + $0x10] sm:$0xff]
        %v1002 = vld [vmem:[#allocation7 + $0x18] sm:$0xff]
        %v1003 = vld [vmem:[#allocation7 + $0x20] sm:$0xff]
        %v1004 = vld [vmem:[#allocation7 + $0x28] sm:$0xff]
        %v1005 = vld [vmem:[#allocation7 + $0x30] sm:$0xff]
        %v1006 = vld [vmem:[#allocation7 + $0x38] sm:$0xff]
        %v1007 = vld [vmem:[#allocation7 + $0x40] sm:$0xff]
        %v1008 = vld [vmem:[#allocation7 + $0x48] sm:$0xff]
        %v1009 = vld [vmem:[#allocation7 + $0x50] sm:$0xff]
        %v1010 = vld [vmem:[#allocation7 + $0x58] sm:$0xff]
        %v1011 = vld [vmem:[#allocation7 + $0x60] sm:$0xff]
        %v1012 = vld [vmem:[#allocation7 + $0x68] sm:$0xff]
        %v1013 = vld [vmem:[#allocation7 + $0x70] sm:$0xff]
        %v1014 = vld [vmem:[#allocation7 + $0x78] sm:$0xff]
        %v1015 = vld [vmem:[#allocation7 + $0x80] sm:$0xff]
        %v1016 = vld [vmem:[#allocation7 + $0x88] sm:$0xff]
        %v1017 = vld [vmem:[#allocation7 + $0x90] sm:$0xff]
        %v1018 = vld [vmem:[#allocation7 + $0x98] sm:$0xff]
        %v1019 = vld [vmem:[#allocation7 + $0xa0] sm:$0xff]
        %v1020 = vld [vmem:[#allocation7 + $0xa8] sm:$0xff]
        %v1021 = vld [vmem:[#allocation7 + $0xb0] sm:$0xff]
        %v1022 = vld [vmem:[#allocation7 + $0xb8] sm:$0xff]
        %v1023 = vld [vmem:[#allocation7 + $0xc0] sm:$0xff]
        %v1024 = vld [vmem:[#allocation7 + $0xc8] sm:$0xff]
        %v1025 = vld [vmem:[#allocation7 + $0xd0] sm:$0xff]
        %v1026 = vld [vmem:[#allocation7 + $0xd8] sm:$0xff]
        %v1027 = vld [vmem:[#allocation7 + $0xe0] sm:$0xff]
        %v1028 = vld [vmem:[#allocation7 + $0xe8] sm:$0xff]
        %v1029 = vld [vmem:[#allocation7 + $0xf0] sm:$0xff]
        %v1030 = vld [vmem:[#allocation7 + $0xf8] sm:$0xff]
        %v1031 = vld [vmem:[#allocation7 + $0x100] sm:$0xff]
        %v1032 = vld [vmem:[#allocation7 + $0x108] sm:$0xff]
        %v1033 = vld [vmem:[#allocation7 + $0x110] sm:$0xff]
        %v1034 = vld [vmem:[#allocation7 + $0x118] sm:$0xff]
        %v1035 = vld [vmem:[#allocation7 + $0x120] sm:$0xff]
        %v1036 = vld [vmem:[#allocation7 + $0x128] sm:$0xff]
        %v1037 = vld [vmem:[#allocation7 + $0x130] sm:$0xff]
        %v1038 = vld [vmem:[#allocation7 + $0x138] sm:$0xff]
        %v1039 = vld [vmem:[#allocation7 + $0x140] sm:$0xff]
        %v1040 = vld [vmem:[#allocation7 + $0x148] sm:$0xff]
        %v1041 = vld [vmem:[#allocation7 + $0x150] sm:$0xff]
        %v1042 = vld [vmem:[#allocation7 + $0x158] sm:$0xff]
        %v1043 = vld [vmem:[#allocation7 + $0x160] sm:$0xff]
        %v1044 = vld [vmem:[#allocation7 + $0x168] sm:$0xff]
        %v1045 = vld [vmem:[#allocation7 + $0x170] sm:$0xff]
        %v1046 = vld [vmem:[#allocation7 + $0x178] sm:$0xff]
        %v1047 = vld [vmem:[#allocation7 + $0x180] sm:$0xff]
        %v1048 = vld [vmem:[#allocation7 + $0x188] sm:$0xff]
        %v1049 = vld [vmem:[#allocation7 + $0x190] sm:$0xff]
        %v1050 = vld [vmem:[#allocation7 + $0x198] sm:$0xff]
        %v1051 = vld [vmem:[#allocation7 + $0x1a0] sm:$0xff]
        %v1052 = vld [vmem:[#allocation7 + $0x1a8] sm:$0xff]
        %v1053 = vld [vmem:[#allocation7 + $0x1b0] sm:$0xff]
        %v1054 = vld [vmem:[#allocation7 + $0x1b8] sm:$0xff]
        %v1055 = vld [vmem:[#allocation7 + $0x1c0] sm:$0xff]
        %v1056 = vld [vmem:[#allocation7 + $0x1c8] sm:$0xff]
        %v1057 = vld [vmem:[#allocation7 + $0x1d0] sm:$0xff]
        %v1058 = vld [vmem:[#allocation7 + $0x1d8] sm:$0xff]
        %v1059 = vld [vmem:[#allocation7 + $0x1e0] sm:$0xff]
        %v1060 = vld [vmem:[#allocation7 + $0x1e8] sm:$0xff]
        %v1061 = vld [vmem:[#allocation7 + $0x1f0] sm:$0xff]
        %v1062 = vld [vmem:[#allocation7 + $0x1f8] sm:$0xff]
        %s1063 = scalar_lea.vmem [#allocation7], 512
        %v1064 = vld [vmem:[%s1063] sm:$0xff]
        %v1065 = vld [vmem:[%s1063 + $0x8] sm:$0xff]
        %v1066 = vld [vmem:[%s1063 + $0x10] sm:$0xff]
        %v1067 = vld [vmem:[%s1063 + $0x18] sm:$0xff]
        %v1068 = vld [vmem:[%s1063 + $0x20] sm:$0xff]
        %v1069 = vld [vmem:[%s1063 + $0x28] sm:$0xff]
        %v1070 = vld [vmem:[%s1063 + $0x30] sm:$0xff]
        %v1071 = vld [vmem:[%s1063 + $0x38] sm:$0xff]
        %v1072 = vld [vmem:[%s1063 + $0x40] sm:$0xff]
        %v1073 = vld [vmem:[%s1063 + $0x48] sm:$0xff]
        %v1074 = vld [vmem:[%s1063 + $0x50] sm:$0xff]
        %v1075 = vld [vmem:[%s1063 + $0x58] sm:$0xff]
        %v1076 = vld [vmem:[%s1063 + $0x60] sm:$0xff]
        %v1077 = vld [vmem:[%s1063 + $0x68] sm:$0xff]
        %v1078 = vld [vmem:[%s1063 + $0x70] sm:$0xff]
        %v1079 = vld [vmem:[%s1063 + $0x78] sm:$0xff]
        %v1080 = vld [vmem:[%s1063 + $0x80] sm:$0xff]
        %v1081 = vld [vmem:[%s1063 + $0x88] sm:$0xff]
        %v1082 = vld [vmem:[%s1063 + $0x90] sm:$0xff]
        %v1083 = vld [vmem:[%s1063 + $0x98] sm:$0xff]
        %v1084 = vld [vmem:[%s1063 + $0xa0] sm:$0xff]
        %v1085 = vld [vmem:[%s1063 + $0xa8] sm:$0xff]
        %v1086 = vld [vmem:[%s1063 + $0xb0] sm:$0xff]
        %v1087 = vld [vmem:[%s1063 + $0xb8] sm:$0xff]
        %v1088 = vld [vmem:[%s1063 + $0xc0] sm:$0xff]
        %v1089 = vld [vmem:[%s1063 + $0xc8] sm:$0xff]
        %v1090 = vld [vmem:[%s1063 + $0xd0] sm:$0xff]
        %v1091 = vld [vmem:[%s1063 + $0xd8] sm:$0xff]
        %v1092 = vld [vmem:[%s1063 + $0xe0] sm:$0xff]
        %v1093 = vld [vmem:[%s1063 + $0xe8] sm:$0xff]
        %v1094 = vld [vmem:[%s1063 + $0xf0] sm:$0xff]
        %v1095 = vld [vmem:[%s1063 + $0xf8] sm:$0xff]
        %v1096 = vld [vmem:[%s1063 + $0x100] sm:$0xff]
        %v1097 = vld [vmem:[%s1063 + $0x108] sm:$0xff]
        %v1098 = vld [vmem:[%s1063 + $0x110] sm:$0xff]
        %v1099 = vld [vmem:[%s1063 + $0x118] sm:$0xff]
        %v1100 = vld [vmem:[%s1063 + $0x120] sm:$0xff]
        %v1101 = vld [vmem:[%s1063 + $0x128] sm:$0xff]
        %v1102 = vld [vmem:[%s1063 + $0x130] sm:$0xff]
        %v1103 = vld [vmem:[%s1063 + $0x138] sm:$0xff]
        %v1104 = vld [vmem:[%s1063 + $0x140] sm:$0xff]
        %v1105 = vld [vmem:[%s1063 + $0x148] sm:$0xff]
        %v1106 = vld [vmem:[%s1063 + $0x150] sm:$0xff]
        %v1107 = vld [vmem:[%s1063 + $0x158] sm:$0xff]
        %v1108 = vld [vmem:[%s1063 + $0x160] sm:$0xff]
        %v1109 = vld [vmem:[%s1063 + $0x168] sm:$0xff]
        %v1110 = vld [vmem:[%s1063 + $0x170] sm:$0xff]
        %v1111 = vld [vmem:[%s1063 + $0x178] sm:$0xff]
        %v1112 = vld [vmem:[%s1063 + $0x180] sm:$0xff]
        %v1113 = vld [vmem:[%s1063 + $0x188] sm:$0xff]
        %v1114 = vld [vmem:[%s1063 + $0x190] sm:$0xff]
        %v1115 = vld [vmem:[%s1063 + $0x198] sm:$0xff]
        %v1116 = vld [vmem:[%s1063 + $0x1a0] sm:$0xff]
        %v1117 = vld [vmem:[%s1063 + $0x1a8] sm:$0xff]
        %v1118 = vld [vmem:[%s1063 + $0x1b0] sm:$0xff]
        %v1119 = vld [vmem:[%s1063 + $0x1b8] sm:$0xff]
        %v1120 = vld [vmem:[%s1063 + $0x1c0] sm:$0xff]
        %v1121 = vld [vmem:[%s1063 + $0x1c8] sm:$0xff]
        %v1122 = vld [vmem:[%s1063 + $0x1d0] sm:$0xff]
        %v1123 = vld [vmem:[%s1063 + $0x1d8] sm:$0xff]
        %v1124 = vld [vmem:[%s1063 + $0x1e0] sm:$0xff]
        %v1125 = vld [vmem:[%s1063 + $0x1e8] sm:$0xff]
        %v1126 = vld [vmem:[%s1063 + $0x1f0] sm:$0xff]
        %v1127 = vld [vmem:[%s1063 + $0x1f8] sm:$0xff]
        %1128 = vmatpush.msra.mxu0 %v1094
        %1129 = vmatpush.msra.mxu0 %v1092
        %1130 = vmatpush.msra.mxu0 %v1090
        %1131 = vmatpush.msra.mxu0 %v1088
        %1132 = vmatpush.msra.mxu0 %v1086
        %1133 = vmatpush.msra.mxu0 %v1084
        %1134 = vmatpush.msra.mxu0 %v1082
        %1135 = vmatpush.msra.mxu0 %v1080
        %1136 = vmatpush.msra.mxu0 %v1078
        %1137 = vmatpush.msra.mxu0 %v1076
        %1138 = vmatpush.msra.mxu0 %v1074
        %1139 = vmatpush.msra.mxu0 %v1072
        %1140 = vmatpush.msra.mxu0 %v1070
        %1141 = vmatpush.msra.mxu0 %v1068
        %1142 = vmatpush.msra.mxu0 %v1066
        %1143 = vmatpush.msra.mxu0 %v1064
        %1144 = vmatmul.f32.gmra.mxu0 %v971
        %v1145 = vpop.f32.mrf.mxu0
        %v1146 = vadd.f32 0.0, %v1145
        %1147 = vmatmul.f32.gmra.mxu0 %v973
        %v1148 = vpop.f32.mrf.mxu0
        %v1149 = vadd.f32 0.0, %v1148
        %1150 = vdwg.mxu0
        %1151 = vmatpush.msra.mxu0 %v1126
        %1152 = vmatpush.msra.mxu0 %v1124
        %1153 = vmatpush.msra.mxu0 %v1122
        %1154 = vmatpush.msra.mxu0 %v1120
        %1155 = vmatpush.msra.mxu0 %v1118
        %1156 = vmatpush.msra.mxu0 %v1116
        %1157 = vmatpush.msra.mxu0 %v1114
        %1158 = vmatpush.msra.mxu0 %v1112
        %1159 = vmatpush.msra.mxu0 %v1110
        %1160 = vmatpush.msra.mxu0 %v1108
        %1161 = vmatpush.msra.mxu0 %v1106
        %1162 = vmatpush.msra.mxu0 %v1104
        %1163 = vmatpush.msra.mxu0 %v1102
        %1164 = vmatpush.msra.mxu0 %v1100
        %1165 = vmatpush.msra.mxu0 %v1098
        %1166 = vmatpush.msra.mxu0 %v1096
        %1167 = vmatmul.f32.gmra.mxu0 %v972
        %v1168 = vpop.f32.mrf.mxu0
        %v1169 = vadd.f32 %v1146, %v1168
        %1170 = vmatmul.f32.gmra.mxu0 %v974
        %v1171 = vpop.f32.mrf.mxu0
        %v1172 = vadd.f32 %v1149, %v1171
        %1173 = vdwg.mxu0
        %1174 = vmatpush.msra.mxu0 %v1095
        %1175 = vmatpush.msra.mxu0 %v1093
        %1176 = vmatpush.msra.mxu0 %v1091
        %1177 = vmatpush.msra.mxu0 %v1089
        %1178 = vmatpush.msra.mxu0 %v1087
        %1179 = vmatpush.msra.mxu0 %v1085
        %1180 = vmatpush.msra.mxu0 %v1083
        %1181 = vmatpush.msra.mxu0 %v1081
        %1182 = vmatpush.msra.mxu0 %v1079
        %1183 = vmatpush.msra.mxu0 %v1077
        %1184 = vmatpush.msra.mxu0 %v1075
        %1185 = vmatpush.msra.mxu0 %v1073
        %1186 = vmatpush.msra.mxu0 %v1071
        %1187 = vmatpush.msra.mxu0 %v1069
        %1188 = vmatpush.msra.mxu0 %v1067
        %1189 = vmatpush.msra.mxu0 %v1065
        %1190 = vmatmul.f32.gmra.mxu0 %v971
        %v1191 = vpop.f32.mrf.mxu0
        %v1192 = vadd.f32 0.0, %v1191
        %1193 = vmatmul.f32.gmra.mxu0 %v973
        %v1194 = vpop.f32.mrf.mxu0
        %v1195 = vadd.f32 0.0, %v1194
        %1196 = vdwg.mxu0
        %1197 = vmatpush.msra.mxu0 %v1127
        %1198 = vmatpush.msra.mxu0 %v1125
        %1199 = vmatpush.msra.mxu0 %v1123
        %1200 = vmatpush.msra.mxu0 %v1121
        %1201 = vmatpush.msra.mxu0 %v1119
        %1202 = vmatpush.msra.mxu0 %v1117
        %1203 = vmatpush.msra.mxu0 %v1115
        %1204 = vmatpush.msra.mxu0 %v1113
        %1205 = vmatpush.msra.mxu0 %v1111
        %1206 = vmatpush.msra.mxu0 %v1109
        %1207 = vmatpush.msra.mxu0 %v1107
        %1208 = vmatpush.msra.mxu0 %v1105
        %1209 = vmatpush.msra.mxu0 %v1103
        %1210 = vmatpush.msra.mxu0 %v1101
        %1211 = vmatpush.msra.mxu0 %v1099
        %1212 = vmatpush.msra.mxu0 %v1097
        %1213 = vmatmul.f32.gmra.mxu0 %v972
        %v1214 = vpop.f32.mrf.mxu0
        %v1215 = vadd.f32 %v1192, %v1214
        %1216 = vmatmul.f32.gmra.mxu0 %v974
        %v1217 = vpop.f32.mrf.mxu0
        %v1218 = vadd.f32 %v1195, %v1217
        %1219 = vdwg.mxu0
        %1220 = vmatpush.msra.mxu0 %v1029
        %1221 = vmatpush.msra.mxu0 %v1027
        %1222 = vmatpush.msra.mxu0 %v1025
        %1223 = vmatpush.msra.mxu0 %v1023
        %1224 = vmatpush.msra.mxu0 %v1021
        %1225 = vmatpush.msra.mxu0 %v1019
        %1226 = vmatpush.msra.mxu0 %v1017
        %1227 = vmatpush.msra.mxu0 %v1015
        %1228 = vmatpush.msra.mxu0 %v1013
        %1229 = vmatpush.msra.mxu0 %v1011
        %1230 = vmatpush.msra.mxu0 %v1009
        %1231 = vmatpush.msra.mxu0 %v1007
        %1232 = vmatpush.msra.mxu0 %v1005
        %1233 = vmatpush.msra.mxu0 %v1003
        %1234 = vmatpush.msra.mxu0 %v1001
        %1235 = vmatpush.msra.mxu0 %v999
        %1236 = vmatmul.f32.gmra.mxu0 %v983
        %v1237 = vpop.f32.mrf.mxu0
        %v1238 = vadd.f32 %v1169, %v1237
        %1239 = vmatmul.f32.gmra.mxu0 %v985
        %v1240 = vpop.f32.mrf.mxu0
        %v1241 = vadd.f32 %v1172, %v1240
        %1242 = vdwg.mxu0
        %1243 = vmatpush.msra.mxu0 %v1061
        %1244 = vmatpush.msra.mxu0 %v1059
        %1245 = vmatpush.msra.mxu0 %v1057
        %1246 = vmatpush.msra.mxu0 %v1055
        %1247 = vmatpush.msra.mxu0 %v1053
        %1248 = vmatpush.msra.mxu0 %v1051
        %1249 = vmatpush.msra.mxu0 %v1049
        %1250 = vmatpush.msra.mxu0 %v1047
        %1251 = vmatpush.msra.mxu0 %v1045
        %1252 = vmatpush.msra.mxu0 %v1043
        %1253 = vmatpush.msra.mxu0 %v1041
        %1254 = vmatpush.msra.mxu0 %v1039
        %1255 = vmatpush.msra.mxu0 %v1037
        %1256 = vmatpush.msra.mxu0 %v1035
        %1257 = vmatpush.msra.mxu0 %v1033
        %1258 = vmatpush.msra.mxu0 %v1031
        %1259 = vmatmul.f32.gmra.mxu0 %v984
        %v1260 = vpop.f32.mrf.mxu0
        %v1261 = vadd.f32 %v1238, %v1260
        %1262 = vmatmul.f32.gmra.mxu0 %v986
        %v1263 = vpop.f32.mrf.mxu0
        %v1264 = vadd.f32 %v1241, %v1263
        %1265 = vdwg.mxu0
        %1266 = vmatpush.msra.mxu0 %v1030
        %1267 = vmatpush.msra.mxu0 %v1028
        %1268 = vmatpush.msra.mxu0 %v1026
        %1269 = vmatpush.msra.mxu0 %v1024
        %1270 = vmatpush.msra.mxu0 %v1022
        %1271 = vmatpush.msra.mxu0 %v1020
        %1272 = vmatpush.msra.mxu0 %v1018
        %1273 = vmatpush.msra.mxu0 %v1016
        %1274 = vmatpush.msra.mxu0 %v1014
        %1275 = vmatpush.msra.mxu0 %v1012
        %1276 = vmatpush.msra.mxu0 %v1010
        %1277 = vmatpush.msra.mxu0 %v1008
        %1278 = vmatpush.msra.mxu0 %v1006
        %1279 = vmatpush.msra.mxu0 %v1004
        %1280 = vmatpush.msra.mxu0 %v1002
        %1281 = vmatpush.msra.mxu0 %v1000
        %1282 = vmatmul.f32.gmra.mxu0 %v983
        %v1283 = vpop.f32.mrf.mxu0
        %v1284 = vadd.f32 %v1215, %v1283
        %1285 = vmatmul.f32.gmra.mxu0 %v985
        %v1286 = vpop.f32.mrf.mxu0
        %v1287 = vadd.f32 %v1218, %v1286
        %1288 = vdwg.mxu0
        %1289 = vmatpush.msra.mxu0 %v1062
        %1290 = vmatpush.msra.mxu0 %v1060
        %1291 = vmatpush.msra.mxu0 %v1058
        %1292 = vmatpush.msra.mxu0 %v1056
        %1293 = vmatpush.msra.mxu0 %v1054
        %1294 = vmatpush.msra.mxu0 %v1052
        %1295 = vmatpush.msra.mxu0 %v1050
        %1296 = vmatpush.msra.mxu0 %v1048
        %1297 = vmatpush.msra.mxu0 %v1046
        %1298 = vmatpush.msra.mxu0 %v1044
        %1299 = vmatpush.msra.mxu0 %v1042
        %1300 = vmatpush.msra.mxu0 %v1040
        %1301 = vmatpush.msra.mxu0 %v1038
        %1302 = vmatpush.msra.mxu0 %v1036
        %1303 = vmatpush.msra.mxu0 %v1034
        %1304 = vmatpush.msra.mxu0 %v1032
        %1305 = vmatmul.f32.gmra.mxu0 %v984
        %v1306 = vpop.f32.mrf.mxu0
        %v1307 = vadd.f32 %v1284, %v1306
        %1308 = vmatmul.f32.gmra.mxu0 %v986
        %v1309 = vpop.f32.mrf.mxu0
        %v1310 = vadd.f32 %v1287, %v1309
        %1311 = vdwg.mxu0
        %s1312 = scalar_lea.vmem [#allocation7], 1024
        %v1313 = vld [vmem:[%s1312] sm:$0xff]
        %v1314 = vld [vmem:[%s1312 + $0x8] sm:$0xff]
        %v1315 = vld [vmem:[%s1312 + $0x10] sm:$0xff]
        %v1316 = vld [vmem:[%s1312 + $0x18] sm:$0xff]
        %v1317 = vld [vmem:[%s1312 + $0x20] sm:$0xff]
        %v1318 = vld [vmem:[%s1312 + $0x28] sm:$0xff]
        %v1319 = vld [vmem:[%s1312 + $0x30] sm:$0xff]
        %v1320 = vld [vmem:[%s1312 + $0x38] sm:$0xff]
        %v1321 = vld [vmem:[%s1312 + $0x40] sm:$0xff]
        %v1322 = vld [vmem:[%s1312 + $0x48] sm:$0xff]
        %v1323 = vld [vmem:[%s1312 + $0x50] sm:$0xff]
        %v1324 = vld [vmem:[%s1312 + $0x58] sm:$0xff]
        %v1325 = vld [vmem:[%s1312 + $0x60] sm:$0xff]
        %v1326 = vld [vmem:[%s1312 + $0x68] sm:$0xff]
        %v1327 = vld [vmem:[%s1312 + $0x70] sm:$0xff]
        %v1328 = vld [vmem:[%s1312 + $0x78] sm:$0xff]
        %v1329 = vld [vmem:[%s1312 + $0x80] sm:$0xff]
        %v1330 = vld [vmem:[%s1312 + $0x88] sm:$0xff]
        %v1331 = vld [vmem:[%s1312 + $0x90] sm:$0xff]
        %v1332 = vld [vmem:[%s1312 + $0x98] sm:$0xff]
        %v1333 = vld [vmem:[%s1312 + $0xa0] sm:$0xff]
        %v1334 = vld [vmem:[%s1312 + $0xa8] sm:$0xff]
        %v1335 = vld [vmem:[%s1312 + $0xb0] sm:$0xff]
        %v1336 = vld [vmem:[%s1312 + $0xb8] sm:$0xff]
        %v1337 = vld [vmem:[%s1312 + $0xc0] sm:$0xff]
        %v1338 = vld [vmem:[%s1312 + $0xc8] sm:$0xff]
        %v1339 = vld [vmem:[%s1312 + $0xd0] sm:$0xff]
        %v1340 = vld [vmem:[%s1312 + $0xd8] sm:$0xff]
        %v1341 = vld [vmem:[%s1312 + $0xe0] sm:$0xff]
        %v1342 = vld [vmem:[%s1312 + $0xe8] sm:$0xff]
        %v1343 = vld [vmem:[%s1312 + $0xf0] sm:$0xff]
        %v1344 = vld [vmem:[%s1312 + $0xf8] sm:$0xff]
        %v1345 = vld [vmem:[%s1312 + $0x100] sm:$0xff]
        %v1346 = vld [vmem:[%s1312 + $0x108] sm:$0xff]
        %v1347 = vld [vmem:[%s1312 + $0x110] sm:$0xff]
        %v1348 = vld [vmem:[%s1312 + $0x118] sm:$0xff]
        %v1349 = vld [vmem:[%s1312 + $0x120] sm:$0xff]
        %v1350 = vld [vmem:[%s1312 + $0x128] sm:$0xff]
        %v1351 = vld [vmem:[%s1312 + $0x130] sm:$0xff]
        %v1352 = vld [vmem:[%s1312 + $0x138] sm:$0xff]
        %v1353 = vld [vmem:[%s1312 + $0x140] sm:$0xff]
        %v1354 = vld [vmem:[%s1312 + $0x148] sm:$0xff]
        %v1355 = vld [vmem:[%s1312 + $0x150] sm:$0xff]
        %v1356 = vld [vmem:[%s1312 + $0x158] sm:$0xff]
        %v1357 = vld [vmem:[%s1312 + $0x160] sm:$0xff]
        %v1358 = vld [vmem:[%s1312 + $0x168] sm:$0xff]
        %v1359 = vld [vmem:[%s1312 + $0x170] sm:$0xff]
        %v1360 = vld [vmem:[%s1312 + $0x178] sm:$0xff]
        %v1361 = vld [vmem:[%s1312 + $0x180] sm:$0xff]
        %v1362 = vld [vmem:[%s1312 + $0x188] sm:$0xff]
        %v1363 = vld [vmem:[%s1312 + $0x190] sm:$0xff]
        %v1364 = vld [vmem:[%s1312 + $0x198] sm:$0xff]
        %v1365 = vld [vmem:[%s1312 + $0x1a0] sm:$0xff]
        %v1366 = vld [vmem:[%s1312 + $0x1a8] sm:$0xff]
        %v1367 = vld [vmem:[%s1312 + $0x1b0] sm:$0xff]
        %v1368 = vld [vmem:[%s1312 + $0x1b8] sm:$0xff]
        %v1369 = vld [vmem:[%s1312 + $0x1c0] sm:$0xff]
        %v1370 = vld [vmem:[%s1312 + $0x1c8] sm:$0xff]
        %v1371 = vld [vmem:[%s1312 + $0x1d0] sm:$0xff]
        %v1372 = vld [vmem:[%s1312 + $0x1d8] sm:$0xff]
        %v1373 = vld [vmem:[%s1312 + $0x1e0] sm:$0xff]
        %v1374 = vld [vmem:[%s1312 + $0x1e8] sm:$0xff]
        %v1375 = vld [vmem:[%s1312 + $0x1f0] sm:$0xff]
        %v1376 = vld [vmem:[%s1312 + $0x1f8] sm:$0xff]
        %1377 = vmatpush.msra.mxu0 %v1343
        %1378 = vmatpush.msra.mxu0 %v1341
        %1379 = vmatpush.msra.mxu0 %v1339
        %1380 = vmatpush.msra.mxu0 %v1337
        %1381 = vmatpush.msra.mxu0 %v1335
        %1382 = vmatpush.msra.mxu0 %v1333
        %1383 = vmatpush.msra.mxu0 %v1331
        %1384 = vmatpush.msra.mxu0 %v1329
        %1385 = vmatpush.msra.mxu0 %v1327
        %1386 = vmatpush.msra.mxu0 %v1325
        %1387 = vmatpush.msra.mxu0 %v1323
        %1388 = vmatpush.msra.mxu0 %v1321
        %1389 = vmatpush.msra.mxu0 %v1319
        %1390 = vmatpush.msra.mxu0 %v1317
        %1391 = vmatpush.msra.mxu0 %v1315
        %1392 = vmatpush.msra.mxu0 %v1313
        %1393 = vmatmul.f32.gmra.mxu0 %v995
        %v1394 = vpop.f32.mrf.mxu0
        %v1395 = vadd.f32 0.0, %v1394
        %1396 = vmatmul.f32.gmra.mxu0 %v997
        %v1397 = vpop.f32.mrf.mxu0
        %v1398 = vadd.f32 0.0, %v1397
        %1399 = vdwg.mxu0
        %1400 = vmatpush.msra.mxu0 %v1375
        %1401 = vmatpush.msra.mxu0 %v1373
        %1402 = vmatpush.msra.mxu0 %v1371
        %1403 = vmatpush.msra.mxu0 %v1369
        %1404 = vmatpush.msra.mxu0 %v1367
        %1405 = vmatpush.msra.mxu0 %v1365
        %1406 = vmatpush.msra.mxu0 %v1363
        %1407 = vmatpush.msra.mxu0 %v1361
        %1408 = vmatpush.msra.mxu0 %v1359
        %1409 = vmatpush.msra.mxu0 %v1357
        %1410 = vmatpush.msra.mxu0 %v1355
        %1411 = vmatpush.msra.mxu0 %v1353
        %1412 = vmatpush.msra.mxu0 %v1351
        %1413 = vmatpush.msra.mxu0 %v1349
        %1414 = vmatpush.msra.mxu0 %v1347
        %1415 = vmatpush.msra.mxu0 %v1345
        %1416 = vmatmul.f32.gmra.mxu0 %v996
        %v1417 = vpop.f32.mrf.mxu0
        %v1418 = vadd.f32 %v1395, %v1417
        %1419 = vmatmul.f32.gmra.mxu0 %v998
        %v1420 = vpop.f32.mrf.mxu0
        %v1421 = vadd.f32 %v1398, %v1420
        %1422 = vdwg.mxu0
        %1423 = vmatpush.msra.mxu0 %v1344
        %1424 = vmatpush.msra.mxu0 %v1342
        %1425 = vmatpush.msra.mxu0 %v1340
        %1426 = vmatpush.msra.mxu0 %v1338
        %1427 = vmatpush.msra.mxu0 %v1336
        %1428 = vmatpush.msra.mxu0 %v1334
        %1429 = vmatpush.msra.mxu0 %v1332
        %1430 = vmatpush.msra.mxu0 %v1330
        %1431 = vmatpush.msra.mxu0 %v1328
        %1432 = vmatpush.msra.mxu0 %v1326
        %1433 = vmatpush.msra.mxu0 %v1324
        %1434 = vmatpush.msra.mxu0 %v1322
        %1435 = vmatpush.msra.mxu0 %v1320
        %1436 = vmatpush.msra.mxu0 %v1318
        %1437 = vmatpush.msra.mxu0 %v1316
        %1438 = vmatpush.msra.mxu0 %v1314
        %1439 = vmatmul.f32.gmra.mxu0 %v995
        %v1440 = vpop.f32.mrf.mxu0
        %v1441 = vadd.f32 0.0, %v1440
        %1442 = vmatmul.f32.gmra.mxu0 %v997
        %v1443 = vpop.f32.mrf.mxu0
        %v1444 = vadd.f32 0.0, %v1443
        %1445 = vdwg.mxu0
        %1446 = vmatpush.msra.mxu0 %v1376
        %1447 = vmatpush.msra.mxu0 %v1374
        %1448 = vmatpush.msra.mxu0 %v1372
        %1449 = vmatpush.msra.mxu0 %v1370
        %1450 = vmatpush.msra.mxu0 %v1368
        %1451 = vmatpush.msra.mxu0 %v1366
        %1452 = vmatpush.msra.mxu0 %v1364
        %1453 = vmatpush.msra.mxu0 %v1362
        %1454 = vmatpush.msra.mxu0 %v1360
        %1455 = vmatpush.msra.mxu0 %v1358
        %1456 = vmatpush.msra.mxu0 %v1356
        %1457 = vmatpush.msra.mxu0 %v1354
        %1458 = vmatpush.msra.mxu0 %v1352
        %1459 = vmatpush.msra.mxu0 %v1350
        %1460 = vmatpush.msra.mxu0 %v1348
        %1461 = vmatpush.msra.mxu0 %v1346
        %1462 = vmatmul.f32.gmra.mxu0 %v996
        %v1463 = vpop.f32.mrf.mxu0
        %v1464 = vadd.f32 %v1441, %v1463
        %1465 = vmatmul.f32.gmra.mxu0 %v998
        %v1466 = vpop.f32.mrf.mxu0
        %v1467 = vadd.f32 %v1444, %v1466
        %1468 = vdwg.mxu0
        %v1469 = vadd.f32 %v1261, %v1418
        %v1470 = vadd.f32 %v1307, %v1464
        %v1471 = vadd.f32 %v1264, %v1421
        %v1472 = vadd.f32 %v1310, %v1467
        %v1473 = vld [vmem:[%s5] sm:$0x3]
        %v1475 = vperm.slane %v1473, 0
        %v1476 = vperm.slane %v1473, 1
        %v1479 = vmul.f32 %v1469, %v1475
        %v1480 = vmul.f32 %v1470, %v1476
        %v1481 = vmul.f32 %v1471, %v1475
        %v1482 = vmul.f32 %v1472, %v1476
        %v1483 = vld [vmem:[%s6] sm:$0x3]
        %v1485 = vperm.slane %v1483, 0
        %v1486 = vperm.slane %v1483, 1
        %v1489 = vadd.f32 %v1479, %v1485
        %v1490 = vadd.f32 %v1480, %v1486
        %v1491 = vadd.f32 %v1481, %v1485
        %v1492 = vadd.f32 %v1482, %v1486
        %v1493 = vmax.f32 %v1489, 0.0
        %v1494 = vmax.f32 %v1490, 0.0
        %v1495 = vmax.f32 %v1491, 0.0
        %v1496 = vmax.f32 %v1492, 0.0
        %v1497 = vadd.f32 %v1493, %v1495
        %v1498 = vrot.slane %v1497, 4
        %v1499 = vadd.f32 %v1497, %v1498
        %v1500 = vrot.slane %v1499, 2
        %v1501 = vadd.f32 %v1499, %v1500
        %v1502 = vrot.slane %v1501, 1
        %v1503 = vadd.f32 %v1501, %v1502
        %v1504 = vadd.f32 %v1494, %v1496
        %v1505 = vrot.slane %v1504, 4
        %v1506 = vadd.f32 %v1504, %v1505
        %v1507 = vrot.slane %v1506, 2
        %v1508 = vadd.f32 %v1506, %v1507
        %v1509 = vrot.slane %v1508, 1
        %v1510 = vadd.f32 %v1508, %v1509
        %1512 = vrot.lane.b32.xlu0 %v1503, 112
        %v1513 = vpop.permute.xlu0 %1512
        %v1515 = vadd.f32 %v1503, %v1513
        %1516 = vrot.lane.b32.xlu0 %v1503, 96
        %v1517 = vpop.permute.xlu0 %1516
        %v1519 = vadd.f32 %v1515, %v1517
        %1520 = vrot.lane.b32.xlu0 %v1503, 80
        %v1521 = vpop.permute.xlu0 %1520
        %v1523 = vadd.f32 %v1519, %v1521
        %1524 = vrot.lane.b32.xlu0 %v1503, 64
        %v1525 = vpop.permute.xlu0 %1524
        %v1527 = vadd.f32 %v1523, %v1525
        %1528 = vrot.lane.b32.xlu0 %v1503, 48
        %v1529 = vpop.permute.xlu0 %1528
        %v1531 = vadd.f32 %v1527, %v1529
        %1532 = vrot.lane.b32.xlu0 %v1503, 32
        %v1533 = vpop.permute.xlu0 %1532
        %v1535 = vadd.f32 %v1531, %v1533
        %1536 = vrot.lane.b32.xlu0 %v1503, 16
        %v1537 = vpop.permute.xlu0 %1536
        %v1539 = vadd.f32 %v1535, %v1537
        %v1540 = vadd.f32 %v1539, %v1510
        %1542 = vrot.lane.b32.xlu0 %v1510, 112
        %v1543 = vpop.permute.xlu0 %1542
        %v1545 = vadd.f32 %v1540, %v1543
        %1546 = vrot.lane.b32.xlu0 %v1510, 96
        %v1547 = vpop.permute.xlu0 %1546
        %v1549 = vadd.f32 %v1545, %v1547
        %1550 = vrot.lane.b32.xlu0 %v1510, 80
        %v1551 = vpop.permute.xlu0 %1550
        %v1553 = vadd.f32 %v1549, %v1551
        %1554 = vrot.lane.b32.xlu0 %v1510, 64
        %v1555 = vpop.permute.xlu0 %1554
        %v1557 = vadd.f32 %v1553, %v1555
        %1558 = vrot.lane.b32.xlu0 %v1510, 48
        %v1559 = vpop.permute.xlu0 %1558
        %v1561 = vadd.f32 %v1557, %v1559
        %1562 = vrot.lane.b32.xlu0 %v1510, 32
        %v1563 = vpop.permute.xlu0 %1562
        %v1565 = vadd.f32 %v1561, %v1563
        %1566 = vrot.lane.b32.xlu0 %v1510, 16
        %v1567 = vpop.permute.xlu0 %1566
        %v1569 = vadd.f32 %v1565, %v1567
        %v1570 = vmul.f32 %v1569, 0.00390625
        %v1571 = vld [vmem:[%s7] sm:$0x3]
        %v1572 = vperm.slane %v1570, 0
        %v1573 = vmul.f32 %v1572, %v1571
        %vm1574 = vcmask 123904
        %v1575 = vsel %vm1574, %v1573, 0.0
        %1576 = vadd.xlane.f32.xlu0 %v1575
        %v1577 = vpop.xlane.xlu0 %1576
        %v1578 = vld [vmem:[%s8] sm:$0x3]
        %v1579 = vadd.f32 %v1577, %v1578
        %v1580 = vmax.f32 %v1579, 0.0
        %v1581 = vld [vmem:[%s9] sm:$0xf]
        %1583 = vset.pattern.permute.xlu0 0
        %1584 = vperm.xlu0 %1583, %v1580
        %v1585 = vpop.permute.xlu0 %1584
        %1588 = vst [vmem:[#allocation1] ss:$4 sm:$0xff] %v1581
        %v1589 = vld.sshfl [vmem:[#allocation1] sm:$0xff pattern:$0x73625140]
        %v1590 = vld.sshfl [vmem:[#allocation1 + $0x8] sm:$0xff pattern:$0x73625140]
        %v1593 = vmul.f32 %v1585, %v1589
        %v1594 = vmul.f32 %v1585, %v1590
        %vm1595 = vcmask 1041408
        %v1596 = vsel %vm1595, %v1593, 0.0
        %v1597 = vrot.slane %v1596, 4
        %v1598 = vadd.f32 %v1596, %v1597
        %v1599 = vrot.slane %v1598, 2
        %v1600 = vadd.f32 %v1598, %v1599
        %v1601 = vrot.slane %v1600, 1
        %v1602 = vadd.f32 %v1600, %v1601
        %v1603 = vsel %vm1595, %v1594, 0.0
        %v1604 = vrot.slane %v1603, 4
        %v1605 = vadd.f32 %v1603, %v1604
        %v1606 = vrot.slane %v1605, 2
        %v1607 = vadd.f32 %v1605, %v1606
        %v1608 = vrot.slane %v1607, 1
        %v1609 = vadd.f32 %v1607, %v1608
        %v1610 = vld [vmem:[%s10] sm:$0x3]
        %v1612 = vperm.slane %v1610, 0
        %v1613 = vperm.slane %v1610, 1
        %v1616 = vadd.f32 %v1602, %v1612
        %v1617 = vadd.f32 %v1609, %v1613
        %v1618 = vxor.u32 %v1616, 2147483648
        %v1619 = vxor.u32 %v1617, 2147483648
        %v1620 = vmul.f32 %v1618, 1.442695
        %v1621 = vpow.pop %v1620
        %v1622 = vmul.f32 %v1619, 1.442695
        %v1623 = vpow.pop %v1622
        %v1624 = vadd.f32 %v1621, 1.0
        %v1625 = vadd.f32 %v1623, 1.0
        %v1626 = vrcp.pop %v1624
        %v1627 = vmul.f32 %v1624, %v1626
        %v1628 = vsub.f32 1.0, %v1627
        %v1629 = vmul.f32 %v1626, %v1628
        %v1630 = vadd.f32 %v1626, %v1629
        %vm1631 = vweird.f32 %v1624
        %vm1632 = vweird.f32 %v1626
        %vm1633 = vmor %vm1631, %vm1632
        %v1634 = vsel %vm1633, %v1626, %v1630
        %v1635 = vand.u32 2147483647, %v1624
        %vm1636 = vcmp.eq.f32.partialorder %v1635, 8.507059e+37
        %v1637 = vand.u32 %v1624, 2147483648
        %v1638 = vor.u32 1.1754944e-38, %v1637
        %v1639 = vsel %vm1636, %v1638, %v1634
        %v1640 = vmul.f32 1.0, %v1639
        %v1641 = vrcp.pop %v1625
        %v1642 = vmul.f32 %v1625, %v1641
        %v1643 = vsub.f32 1.0, %v1642
        %v1644 = vmul.f32 %v1641, %v1643
        %v1645 = vadd.f32 %v1641, %v1644
        %vm1646 = vweird.f32 %v1625
        %vm1647 = vweird.f32 %v1641
        %vm1648 = vmor %vm1646, %vm1647
        %v1649 = vsel %vm1648, %v1641, %v1645
        %v1650 = vand.u32 2147483647, %v1625
        %vm1651 = vcmp.eq.f32.partialorder %v1650, 8.507059e+37
        %v1652 = vand.u32 %v1625, 2147483648
        %v1653 = vor.u32 1.1754944e-38, %v1652
        %v1654 = vsel %vm1651, %v1653, %v1649
        %v1655 = vmul.f32 1.0, %v1654
        %v1656 = vperm.slane %v1640, 0
        %v1657 = vperm.slane %v1655, 0
        %v1658 = vmul.f32 %v1493, %v1656
        %v1659 = vmul.f32 %v1494, %v1657
        %v1660 = vmul.f32 %v1495, %v1656
        %v1661 = vmul.f32 %v1496, %v1657
        %v1662 = vadd.f32 %v1658, %v440
        %v1663 = vadd.f32 %v1659, %v441
        %v1664 = vadd.f32 %v1660, %v442
        %v1665 = vadd.f32 %v1661, %v443
        %1666 = vst [vmem:[%s439] sm:$0xff] %v1662
        %1667 = vst [vmem:[%s439 + $0x8] sm:$0xff] %v1663
        %1668 = vst [vmem:[%s439 + $0x10] sm:$0xff] %v1664
        %1669 = vst [vmem:[%s439 + $0x18] sm:$0xff] %v1665
        %s1670 = sand.u32 %s273, 1
        %s1671 = scalar_lea.sflag [#allocation4], %s1670
        %s1672 = sand.u32 %s273, 1
        %s1673 = smul.addr %s1672, 32
        %s1674 = scalar_lea.vmem [#allocation8], %s1673
        // Predicated region
        $region77: #{tpu_custom_call.1} parent=63 // pred_check
          %p1675 = pneg %p283
        $region78: #{tpu_custom_call.1} parent=63 // pred_check_branch
          %1677 = sbr.rel (%p1675) target = $region80
        $region79: #{tpu_custom_call.1} parent=63 // pred_region
          %1679 = vsyncadd %s1671, 0
          %s1680 = smul.addr %s29, 4
          %s1681 = smul.addr %s1680, 8
          %s1682 = scalar_lea.hbm %s11, %s1681
          %s1683 = sshll.u32 %s1674, 4
          %s1684 = int_to_ptr.vmem [resolvable:$true] %s1683
          %s1685 = sshll.u32 %s1682, 4
          %s1686 = int_to_ptr.hbm [resolvable:$true] %s1685
          %1691 = dma.vmem_to_hbm [thread:$0]  %s1684, 512, %s1686, %s1671, 256, 256, 16
        $region80: #{tpu_custom_call.1} parent=63 // pred_fallthru
          _
      $region64: #{tpu_custom_call.1} parent=5 // pred_fallthru
        _
      %p1692 = scmp.le.s32.totalorder 2, %s24
      // Predicated region
      $region81: #{tpu_custom_call.1} parent=5 // pred_check
        %p1693 = pneg %p1692
      $region82: #{tpu_custom_call.1} parent=5 // pred_check_branch
        %1695 = sbr.rel (%p1693) target = $region84
      $region83: #{tpu_custom_call.1} parent=5 // pred_region
        %s1696 = ssub.s32 %s24, 2
        // Predicated region
        $region85: #{tpu_custom_call.1} parent=83 // pred_check
          %p1697 = pneg %p289
        $region86: #{tpu_custom_call.1} parent=83 // pred_check_branch
          %1699 = sbr.rel (%p1697) target = $region88
        $region87: #{tpu_custom_call.1} parent=83 // pred_region
          %s1700 = sand.u32 %s274, 1
          %s1701 = scalar_lea.sflag [#allocation4], %s1700
          %s1702 = sand.u32 %s274, 1
          %s1703 = smul.addr %s1702, 32
          %s1704 = scalar_lea.vmem [#allocation8], %s1703
          %1706 = dma.done %s1701, 512
        $region88: #{tpu_custom_call.1} parent=83 // pred_fallthru
          _
      $region84: #{tpu_custom_call.1} parent=5 // pred_fallthru
        _
    $region6: #{tpu_custom_call.1} parent=1 // loop_footer
      %s28 = sadd.s32 1, %s24
    $region7: #{tpu_custom_call.1} parent=1 // loop_footer_branch
      %23 = sbr.rel target = $region3
    $region8: #{tpu_custom_call.1} parent=1 // loop_exit
      _
    %1707 = vsyncpa [#allocation3], 1
    %s1708 = scalar_lea.sflag [#allocation3], 1
    %1709 = vsyncpa %s1708, 1
    %1710 = vsyncpa [#allocation6], 1
    %1711 = vsyncpa [#allocation4], 1
    %s1712 = scalar_lea.sflag [#allocation4], 1
    %1713 = vsyncpa %s1712, 1

</llo_original>
